<compile_context>
chip_gen: v7x
topology: tpu7x:2x2x1
jax: 0.10.0
libtpu: 0.0.40
codegen_flags: <defaults>
</compile_context>

<pallas_src>
import jax
import jax.numpy as jnp
import numpy as np
from jax.experimental import pallas as pl
from jax.experimental.pallas import tpu as pltpu

N_GENES = 128       # n_genes (small synthetic size)
N_PROTEINS = 8      # n_proteins
H1 = 1000           # fixed by the module
H2 = 256            # fixed by the module
H3 = 64 * N_PROTEINS
BATCH = 8


def _round_up(x, m):
    return ((x + m - 1) // m) * m


G_PAD = _round_up(N_GENES, 128)      # 128
H1_PAD = _round_up(H1, 128)          # 1024 (clean MXU K/N tiles)
H2_PAD = _round_up(H2, 128)          # 256
H3_PAD = _round_up(H3, 128)          # 512
P_PAD = _round_up(N_PROTEINS, 128)   # 128 (lane-dense output store)


def _pick_tb(batch):
    """Batch tile: no 16x pad waste for tiny batches, big tiles for large ones."""
    if batch <= 32:
        return max(16, _round_up(batch, 16))       # 16 = bf16 sublane tile
    if batch <= 256:
        return 128
    # Large batch: 512-row tiles amortize the ~0.35us per-grid-step overhead;
    # halve until there are >= 2 tiles so both v7x TensorCores get work.
    tb = 512
    while tb > 128 and _round_up(batch, tb) // tb < 2:
        tb //= 2
    return tb


def net_kernel(x_ref, w1_ref, b1_ref, w2_ref, b2_ref, w3_ref, b3_ref,
               wc_ref, bc_ref, o_ref):
    # fc1 + relu : (TB, 128) @ (128, 1024)   bf16 x bf16 -> f32 acc
    h1 = jnp.dot(x_ref[...], w1_ref[...], preferred_element_type=jnp.float32)
    h1 = jnp.maximum(h1 + b1_ref[...], 0.0).astype(jnp.bfloat16)
    # fc2 + relu : (TB, 1024) @ (1024, 256)
    h2 = jnp.dot(h1, w2_ref[...], preferred_element_type=jnp.float32)
    h2 = jnp.maximum(h2 + b2_ref[...], 0.0).astype(jnp.bfloat16)
    # fc3 + relu : (TB, 256) @ (256, 512)
    h3 = jnp.dot(h2, w3_ref[...], preferred_element_type=jnp.float32)
    h3 = jnp.maximum(h3 + b3_ref[...], 0.0).astype(jnp.bfloat16)
    # grouped Conv1d(kernel=64, groups=P) == block-diagonal matmul : (TB, 512) @ (512, 128)
    c = jnp.dot(h3, wc_ref[...], preferred_element_type=jnp.float32)
    # bf16 store: only 8/128 lanes are real, halve the writeback HBM stream.
    o_ref[...] = jnp.maximum(c + bc_ref[...], 0.0).astype(jnp.bfloat16)


def net_forward_pallas(x, kernel_params):
    """x: (B, n_genes) float32 -> (B, n_proteins, 1) float32 (matches PyTorch NCL output)."""
    w1t, b1, w2t, b2, w3t, b3, wc, bc = kernel_params
    B = x.shape[0]
    TB = _pick_tb(B)
    b_pad = _round_up(B, TB)

    # Cast to bf16; pad only if actually needed (no zeros+scatter extra copy).
    xp = x.astype(jnp.bfloat16)
    pad_b = b_pad - B
    pad_g = G_PAD - N_GENES
    if pad_b or pad_g:
        xp = jnp.pad(xp, ((0, pad_b), (0, pad_g)))

    grid = (b_pad // TB,)
    const = lambda shape: pl.BlockSpec(shape, lambda i: (0, 0))  # VMEM-resident weights

    weight_bytes = sum(int(np.prod(a.shape)) * a.dtype.itemsize
                       for a in (w1t, b1, w2t, b2, w3t, b3, wc, bc))
    flops = 2 * b_pad * (G_PAD * H1_PAD + H1_PAD * H2_PAD
                         + H2_PAD * H3_PAD + H3_PAD * P_PAD)
    bytes_accessed = (b_pad * G_PAD * 2          # x (bf16)
                      + weight_bytes             # weights/biases
                      + b_pad * P_PAD * 2)       # output (bf16)

    out = pl.pallas_call(
        net_kernel,
        out_shape=jax.ShapeDtypeStruct((b_pad, P_PAD), jnp.bfloat16),
        grid_spec=pltpu.PrefetchScalarGridSpec(
            num_scalar_prefetch=0,
            grid=grid,
            in_specs=[
                pl.BlockSpec((TB, G_PAD), lambda i: (i, 0)),  # x tile
                const((G_PAD, H1_PAD)),                       # W1^T (bf16)
                const((1, H1_PAD)),                           # b1   (f32)
                const((H1_PAD, H2_PAD)),                      # W2^T (bf16)
                const((1, H2_PAD)),                           # b2
                const((H2_PAD, H3_PAD)),                      # W3^T (bf16)
                const((1, H3_PAD)),                           # b3
                const((H3_PAD, P_PAD)),                       # block-diag conv weight (bf16)
                const((1, P_PAD)),                            # conv bias
            ],
            out_specs=pl.BlockSpec((TB, P_PAD), lambda i: (i, 0)),
        ),
        compiler_params=pltpu.CompilerParams(
            dimension_semantics=("parallel",),
            vmem_limit_bytes=32 << 20,
        ),
        cost_estimate=pl.CostEstimate(flops=flops, transcendentals=0,
                                      bytes_accessed=bytes_accessed),
    )(xp, w1t, b1, w2t, b2, w3t, b3, wc, bc)

    # Un-pad: only the first B rows / first n_proteins lanes are real.
    # PyTorch forward returns (B, n_proteins, 1) (conv output length 1).
    return out[:B, :N_PROTEINS].astype(jnp.float32).reshape(B, N_PROTEINS, 1)


def init_raw_params(key):
    """Deterministic synthetic parameters with the module's native shapes."""
    ks = jax.random.split(key, 8)
    scale = 0.05
    W1 = scale * jax.random.normal(ks[0], (H1, N_GENES), jnp.float32)        # fc1.weight
    b1 = scale * jax.random.normal(ks[1], (H1,), jnp.float32)
    W2 = scale * jax.random.normal(ks[2], (H2, H1), jnp.float32)             # fc2.weight
    b2 = scale * jax.random.normal(ks[3], (H2,), jnp.float32)
    W3 = scale * jax.random.normal(ks[4], (H3, H2), jnp.float32)             # fc3.weight
    b3 = scale * jax.random.normal(ks[5], (H3,), jnp.float32)
    Wc = scale * jax.random.normal(ks[6], (N_PROTEINS, 1, 64), jnp.float32)  # fc4.weight (P,1,64)
    bc = scale * jax.random.normal(ks[7], (N_PROTEINS,), jnp.float32)        # fc4.bias
    return (W1, b1, W2, b2, W3, b3, Wc, bc)


def prepare_kernel_params(raw_params):
    """Glue: transpose, zero-pad to 128-aligned shapes, build block-diag conv, cast to bf16."""
    W1, b1, W2, b2, W3, b3, Wc, bc = raw_params

    w1t = np.zeros((G_PAD, H1_PAD), np.float32)
    w1t[:N_GENES, :H1] = np.asarray(W1).T
    b1p = np.zeros((1, H1_PAD), np.float32)
    b1p[0, :H1] = np.asarray(b1)

    w2t = np.zeros((H1_PAD, H2_PAD), np.float32)
    w2t[:H1, :H2] = np.asarray(W2).T
    b2p = np.zeros((1, H2_PAD), np.float32)
    b2p[0, :H2] = np.asarray(b2)

    w3t = np.zeros((H2_PAD, H3_PAD), np.float32)
    w3t[:H2, :H3] = np.asarray(W3).T
    b3p = np.zeros((1, H3_PAD), np.float32)
    b3p[0, :H3] = np.asarray(b3)

    wc = np.zeros((H3_PAD, P_PAD), np.float32)
    Wc_np = np.asarray(Wc)
    for p in range(N_PROTEINS):
        wc[p * 64:(p + 1) * 64, p] = Wc_np[p, 0, :]
    bcp = np.zeros((1, P_PAD), np.float32)
    bcp[0, :N_PROTEINS] = np.asarray(bc)

    return (jnp.asarray(w1t, jnp.bfloat16), jnp.asarray(b1p),
            jnp.asarray(w2t, jnp.bfloat16), jnp.asarray(b2p),
            jnp.asarray(w3t, jnp.bfloat16), jnp.asarray(b3p),
            jnp.asarray(wc, jnp.bfloat16), jnp.asarray(bcp))


def net_forward_ref(x, raw_params):
    """Pure-JAX f32 reference mirroring the PyTorch forward exactly."""
    W1, b1, W2, b2, W3, b3, Wc, bc = raw_params
    h = jnp.maximum(x @ W1.T + b1, 0.0)
    h = jnp.maximum(h @ W2.T + b2, 0.0)
    h = jnp.maximum(h @ W3.T + b3, 0.0).reshape(-1, N_PROTEINS, 64)
    # grouped Conv1d, kernel=64, valid conv -> length 1
    conv = jnp.einsum("bpk,pk->bp", h, Wc[:, 0, :]) + bc
    return jnp.maximum(conv, 0.0)[:, :, None]


if __name__ == "__main__":
    key = jax.random.PRNGKey(0)
    kx, kp = jax.random.split(key)
    x = jax.random.normal(kx, (BATCH, N_GENES), jnp.float32)

    raw_params = init_raw_params(kp)
    kernel_params = prepare_kernel_params(raw_params)

    out = jax.block_until_ready(net_forward_pallas(x, kernel_params))
    ref = jax.block_until_ready(net_forward_ref(x, raw_params))

    assert out.shape == (BATCH, N_PROTEINS, 1), out.shape
    # bf16 weights/activations/output with f32 accumulation -> loosened tolerance vs f32 reference.
    np.testing.assert_allclose(np.asarray(out), np.asarray(ref), rtol=3e-2, atol=3e-2)
    print("KERNEL_OK")
</pallas_src>

<mosaic_0001>
module attributes {stable_mosaic.version = 11 : i64} {
  func.func @net_kernel(%arg0: i32, %arg1: memref<16x128xbf16, #tpu.memory_space<vmem>>, %arg2: memref<128x1024xbf16, #tpu.memory_space<vmem>>, %arg3: memref<1x1024xf32, #tpu.memory_space<vmem>>, %arg4: memref<1024x256xbf16, #tpu.memory_space<vmem>>, %arg5: memref<1x256xf32, #tpu.memory_space<vmem>>, %arg6: memref<256x512xbf16, #tpu.memory_space<vmem>>, %arg7: memref<1x512xf32, #tpu.memory_space<vmem>>, %arg8: memref<512x128xbf16, #tpu.memory_space<vmem>>, %arg9: memref<1x128xf32, #tpu.memory_space<vmem>>, %arg10: memref<16x128xbf16, #tpu.memory_space<vmem>>) attributes {dimension_semantics = [#tpu.dimension_semantics<parallel>], iteration_bounds = array<i64: 1>, scalar_prefetch = 0 : i64, scratch_operands = 0 : i64, tpu.core_type = #tpu.core_type<tc>, window_params = [{transform_indices = @transform_0, window_bounds = array<i64: 16, 128>}, {pipeline_mode = #tpu.pipeline_mode<synchronous>, transform_indices = @transform_1, window_bounds = array<i64: 128, 1024>}, {pipeline_mode = #tpu.pipeline_mode<synchronous>, transform_indices = @transform_2, window_bounds = array<i64: 1, 1024>}, {pipeline_mode = #tpu.pipeline_mode<synchronous>, transform_indices = @transform_3, window_bounds = array<i64: 1024, 256>}, {pipeline_mode = #tpu.pipeline_mode<synchronous>, transform_indices = @transform_4, window_bounds = array<i64: 1, 256>}, {pipeline_mode = #tpu.pipeline_mode<synchronous>, transform_indices = @transform_5, window_bounds = array<i64: 256, 512>}, {pipeline_mode = #tpu.pipeline_mode<synchronous>, transform_indices = @transform_6, window_bounds = array<i64: 1, 512>}, {pipeline_mode = #tpu.pipeline_mode<synchronous>, transform_indices = @transform_7, window_bounds = array<i64: 512, 128>}, {pipeline_mode = #tpu.pipeline_mode<synchronous>, transform_indices = @transform_8, window_bounds = array<i64: 1, 128>}, {transform_indices = @transform_9, window_bounds = array<i64: 16, 128>}]} {
    %c0 = arith.constant 0 : index
    %c0_0 = arith.constant 0 : index
    %0 = vector.load %arg1[%c0, %c0_0] : memref<16x128xbf16, #tpu.memory_space<vmem>>, vector<16x128xbf16>
    %c0_1 = arith.constant 0 : index
    %c0_2 = arith.constant 0 : index
    %1 = vector.load %arg2[%c0_1, %c0_2] : memref<128x1024xbf16, #tpu.memory_space<vmem>>, vector<128x1024xbf16>
    %cst = arith.constant dense<0.000000e+00> : vector<16x1024xf32>
    %2 = tpu.matmul %0, %1, %cst {dimension_numbers = #tpu.dot_dimension_numbers<[1], [0], [0], [1], [0, 0, 1, 1], [], []>} : vector<16x128xbf16>, vector<128x1024xbf16>, vector<16x1024xf32> -> vector<16x1024xf32>
    %c0_3 = arith.constant 0 : index
    %c0_4 = arith.constant 0 : index
    %3 = vector.load %arg3[%c0_3, %c0_4] : memref<1x1024xf32, #tpu.memory_space<vmem>>, vector<1x1024xf32>
    %4 = vector.broadcast %3 : vector<1x1024xf32> to vector<16x1024xf32>
    %5 = arith.addf %2, %4 : vector<16x1024xf32>
    %cst_5 = arith.constant 0.000000e+00 : f32
    %6 = vector.broadcast %cst_5 : f32 to vector<16x1024xf32>
    %7 = arith.maximumf %5, %6 : vector<16x1024xf32>
    %8 = arith.truncf %7 : vector<16x1024xf32> to vector<16x1024xbf16>
    %c0_6 = arith.constant 0 : index
    %c0_7 = arith.constant 0 : index
    %9 = vector.load %arg4[%c0_6, %c0_7] : memref<1024x256xbf16, #tpu.memory_space<vmem>>, vector<1024x256xbf16>
    %cst_8 = arith.constant dense<0.000000e+00> : vector<16x256xf32>
    %10 = tpu.matmul %8, %9, %cst_8 {dimension_numbers = #tpu.dot_dimension_numbers<[1], [0], [0], [1], [0, 0, 1, 1], [], []>} : vector<16x1024xbf16>, vector<1024x256xbf16>, vector<16x256xf32> -> vector<16x256xf32>
    %c0_9 = arith.constant 0 : index
    %c0_10 = arith.constant 0 : index
    %11 = vector.load %arg5[%c0_9, %c0_10] : memref<1x256xf32, #tpu.memory_space<vmem>>, vector<1x256xf32>
    %12 = vector.broadcast %11 : vector<1x256xf32> to vector<16x256xf32>
    %13 = arith.addf %10, %12 : vector<16x256xf32>
    %cst_11 = arith.constant 0.000000e+00 : f32
    %14 = vector.broadcast %cst_11 : f32 to vector<16x256xf32>
    %15 = arith.maximumf %13, %14 : vector<16x256xf32>
    %16 = arith.truncf %15 : vector<16x256xf32> to vector<16x256xbf16>
    %c0_12 = arith.constant 0 : index
    %c0_13 = arith.constant 0 : index
    %17 = vector.load %arg6[%c0_12, %c0_13] : memref<256x512xbf16, #tpu.memory_space<vmem>>, vector<256x512xbf16>
    %cst_14 = arith.constant dense<0.000000e+00> : vector<16x512xf32>
    %18 = tpu.matmul %16, %17, %cst_14 {dimension_numbers = #tpu.dot_dimension_numbers<[1], [0], [0], [1], [0, 0, 1, 1], [], []>} : vector<16x256xbf16>, vector<256x512xbf16>, vector<16x512xf32> -> vector<16x512xf32>
    %c0_15 = arith.constant 0 : index
    %c0_16 = arith.constant 0 : index
    %19 = vector.load %arg7[%c0_15, %c0_16] : memref<1x512xf32, #tpu.memory_space<vmem>>, vector<1x512xf32>
    %20 = vector.broadcast %19 : vector<1x512xf32> to vector<16x512xf32>
    %21 = arith.addf %18, %20 : vector<16x512xf32>
    %cst_17 = arith.constant 0.000000e+00 : f32
    %22 = vector.broadcast %cst_17 : f32 to vector<16x512xf32>
    %23 = arith.maximumf %21, %22 : vector<16x512xf32>
    %24 = arith.truncf %23 : vector<16x512xf32> to vector<16x512xbf16>
    %c0_18 = arith.constant 0 : index
    %c0_19 = arith.constant 0 : index
    %25 = vector.load %arg8[%c0_18, %c0_19] : memref<512x128xbf16, #tpu.memory_space<vmem>>, vector<512x128xbf16>
    %cst_20 = arith.constant dense<0.000000e+00> : vector<16x128xf32>
    %26 = tpu.matmul %24, %25, %cst_20 {dimension_numbers = #tpu.dot_dimension_numbers<[1], [0], [0], [1], [0, 0, 1, 1], [], []>} : vector<16x512xbf16>, vector<512x128xbf16>, vector<16x128xf32> -> vector<16x128xf32>
    %c0_21 = arith.constant 0 : index
    %c0_22 = arith.constant 0 : index
    %27 = vector.load %arg9[%c0_21, %c0_22] : memref<1x128xf32, #tpu.memory_space<vmem>>, vector<1x128xf32>
    %28 = vector.broadcast %27 : vector<1x128xf32> to vector<16x128xf32>
    %29 = arith.addf %26, %28 : vector<16x128xf32>
    %cst_23 = arith.constant 0.000000e+00 : f32
    %30 = vector.broadcast %cst_23 : f32 to vector<16x128xf32>
    %31 = arith.maximumf %29, %30 : vector<16x128xf32>
    %32 = arith.truncf %31 : vector<16x128xf32> to vector<16x128xbf16>
    %c0_24 = arith.constant 0 : index
    %c0_25 = arith.constant 0 : index
    %33 = vector.load %arg10[%c0_24, %c0_25] : memref<16x128xbf16, #tpu.memory_space<vmem>>, vector<16x128xbf16>
    tpu.vector_store %arg10[%c0_24, %c0_25], %32 {strides = array<i32>} : memref<16x128xbf16, #tpu.memory_space<vmem>>, vector<16x128xbf16>,
    return
  }
  func.func @transform_0(%arg0: i32) -> (i32, i32) {
    %c0_i32 = arith.constant 0 : i32
    %c0_i32_0 = arith.constant 0 : i32
    return %arg0, %c0_i32 : i32, i32
  }
  func.func @transform_1(%arg0: i32) -> (i32, i32) {
    %c0_i32 = arith.constant 0 : i32
    %c0_i32_0 = arith.constant 0 : i32
    %c0_i32_1 = arith.constant 0 : i32
    return %c0_i32, %c0_i32_0 : i32, i32
  }
  func.func @transform_2(%arg0: i32) -> (i32, i32) {
    %c0_i32 = arith.constant 0 : i32
    %c0_i32_0 = arith.constant 0 : i32
    %c0_i32_1 = arith.constant 0 : i32
    return %c0_i32, %c0_i32_0 : i32, i32
  }
  func.func @transform_3(%arg0: i32) -> (i32, i32) {
    %c0_i32 = arith.constant 0 : i32
    %c0_i32_0 = arith.constant 0 : i32
    %c0_i32_1 = arith.constant 0 : i32
    return %c0_i32, %c0_i32_0 : i32, i32
  }
  func.func @transform_4(%arg0: i32) -> (i32, i32) {
    %c0_i32 = arith.constant 0 : i32
    %c0_i32_0 = arith.constant 0 : i32
    %c0_i32_1 = arith.constant 0 : i32
    return %c0_i32, %c0_i32_0 : i32, i32
  }
  func.func @transform_5(%arg0: i32) -> (i32, i32) {
    %c0_i32 = arith.constant 0 : i32
    %c0_i32_0 = arith.constant 0 : i32
    %c0_i32_1 = arith.constant 0 : i32
    return %c0_i32, %c0_i32_0 : i32, i32
  }
  func.func @transform_6(%arg0: i32) -> (i32, i32) {
    %c0_i32 = arith.constant 0 : i32
    %c0_i32_0 = arith.constant 0 : i32
    %c0_i32_1 = arith.constant 0 : i32
    return %c0_i32, %c0_i32_0 : i32, i32
  }
  func.func @transform_7(%arg0: i32) -> (i32, i32) {
    %c0_i32 = arith.constant 0 : i32
    %c0_i32_0 = arith.constant 0 : i32
    %c0_i32_1 = arith.constant 0 : i32
    return %c0_i32, %c0_i32_0 : i32, i32
  }
  func.func @transform_8(%arg0: i32) -> (i32, i32) {
    %c0_i32 = arith.constant 0 : i32
    %c0_i32_0 = arith.constant 0 : i32
    %c0_i32_1 = arith.constant 0 : i32
    return %c0_i32, %c0_i32_0 : i32, i32
  }
  func.func @transform_9(%arg0: i32) -> (i32, i32) {
    %c0_i32 = arith.constant 0 : i32
    %c0_i32_0 = arith.constant 0 : i32
    return %arg0, %c0_i32 : i32, i32
  }
}

</mosaic_0001>

<llo_original>
// kernel: tpu_custom_call.1
$region0: #{tpu_custom_call.1}
  #allocation0 [shape = 'u32[]', space=smem, size = 0x4, offset = 0x4, fixed_abs, tag = 'smem constant byte address 0x4 - core index']
  #allocation1 [shape = 'u32[144,128]{1,0:T(1,128)}', space=vmem, size = 0x12000, scoped, tag = 'internal scratch']
  %s0 = inlined_call_operand.hbm [shape: bf16[16,128], index: 0, kind: input, shape index: {}]
  %s1 = inlined_call_operand.hbm [shape: bf16[128,1024], index: 1, kind: input, shape index: {}]
  %s2 = inlined_call_operand.hbm [shape: f32[1,1024], index: 2, kind: input, shape index: {}]
  %s3 = inlined_call_operand.hbm [shape: bf16[1024,256], index: 3, kind: input, shape index: {}]
  %s4 = inlined_call_operand.vmem [shape: f32[1,256], index: 4, kind: input, shape index: {}]
  %s5 = inlined_call_operand.hbm [shape: bf16[256,512], index: 5, kind: input, shape index: {}]
  %s6 = inlined_call_operand.vmem [shape: f32[1,512], index: 6, kind: input, shape index: {}]
  %s7 = inlined_call_operand.hbm [shape: bf16[512,128], index: 7, kind: input, shape index: {}]
  %s8 = inlined_call_operand.vmem [shape: f32[1,128], index: 8, kind: input, shape index: {}]
  %s9 = inlined_call_operand.hbm [shape: bf16[16,128], index: 9, kind: output, shape index: {}]
  %s10 = sld [smem:[#allocation0]]
  $region70: #{tpu_custom_call.1} parent=0
    _
  %s12 = ssub.s32 1, %s10
  %s13 = scalar_select 0, %s12, %s10
  $region1: #{tpu_custom_call.1} parent=0
    #allocation2 [shape = 'u8[4096]{0}', space=vmem, size = 0x1000, scoped, tag = 'input window, operand 0, single buffered']
    #allocation3 [shape = 's32[1]{0}', space=sflag, size = 0x4, scoped, tag = 'scoped memory for tpu_custom_call.1']
    #allocation4 [shape = 's32[1]{0}', space=sflag, size = 0x4, scoped, tag = 'scoped memory for tpu_custom_call.1']
    #allocation5 [shape = 'u8[262144]{0}', space=vmem, size = 0x40000, scoped, tag = 'input window, operand 1, single buffered']
    #allocation6 [shape = 's32[1]{0}', space=sflag, size = 0x4, scoped, tag = 'scoped memory for tpu_custom_call.1']
    #allocation7 [shape = 'u8[4096]{0}', space=vmem, size = 0x1000, scoped, tag = 'input window, operand 2, single buffered']
    #allocation8 [shape = 'u8[524288]{0}', space=vmem, size = 0x80000, scoped, tag = 'input window, operand 3, single buffered']
    #allocation9 [shape = 's32[1]{0}', space=sflag, size = 0x4, scoped, tag = 'scoped memory for tpu_custom_call.1']
    #allocation10 [shape = 'u8[262144]{0}', space=vmem, size = 0x40000, scoped, tag = 'input window, operand 5, single buffered']
    #allocation11 [shape = 'u8[131072]{0}', space=vmem, size = 0x20000, scoped, tag = 'input window, operand 7, single buffered']
    #allocation12 [shape = 's32[1]{0}', space=sflag, size = 0x4, scoped, tag = 'scoped memory for tpu_custom_call.1']
    #allocation13 [shape = 'u8[4096]{0}', space=vmem, size = 0x1000, scoped, tag = 'output window, operand 0, single buffered']
    %14 = vsyncpa [#allocation3], 0
    %15 = vsyncpa [#allocation6], 0
    %16 = vsyncpa [#allocation9], 0
    %17 = vsyncpa [#allocation12], 0
    %18 = vsyncpa [#allocation4], 0
    // Predicated region
    $region2: #{tpu_custom_call.1} parent=1 // pred_check
      _
    $region3: #{tpu_custom_call.1} parent=1 // pred_check_branch
      %20 = sbr.rel (0) target = $region5
    $region4: #{tpu_custom_call.1} parent=1 // pred_region
      %s22 = ssub.s32 128, 128
      %23 = vsyncadd [#allocation3], %s22
      %s24 = sshll.u32 [#allocation2], 4
      %s25 = int_to_ptr.vmem [resolvable:$true] %s24
      %30 = dma.hbm_to_vmem [thread:$0]  %s0, 128, %s25, [#allocation3], 64, 64, 4
    $region5: #{tpu_custom_call.1} parent=1 // pred_fallthru
      _
    // Predicated region
    $region6: #{tpu_custom_call.1} parent=1 // pred_check
      _
    $region7: #{tpu_custom_call.1} parent=1 // pred_check_branch
      %32 = sbr.rel (0) target = $region9
    $region8: #{tpu_custom_call.1} parent=1 // pred_region
      %s34 = ssub.s32 8192, 8192
      %35 = vsyncadd [#allocation6], %s34
      %s36 = sshll.u32 [#allocation5], 4
      %s37 = int_to_ptr.vmem [resolvable:$true] %s36
      %42 = dma.hbm_to_vmem [thread:$0]  %s1, 8192, %s37, [#allocation6], 512, 512, 32
    $region9: #{tpu_custom_call.1} parent=1 // pred_fallthru
      _
    // Predicated region
    $region10: #{tpu_custom_call.1} parent=1 // pred_check
      _
    $region11: #{tpu_custom_call.1} parent=1 // pred_check_branch
      %44 = sbr.rel (0) target = $region13
    $region12: #{tpu_custom_call.1} parent=1 // pred_region
      %s46 = ssub.s32 128, 128
      %47 = vsyncadd [#allocation6], %s46
      %s49 = sshll.u32 [#allocation7], 4
      %s50 = int_to_ptr.vmem [resolvable:$true] %s49
      %52 = dma.hbm_to_vmem [thread:$0]  %s2, 128, %s50, [#allocation6]
    $region13: #{tpu_custom_call.1} parent=1 // pred_fallthru
      _
    // Predicated region
    $region14: #{tpu_custom_call.1} parent=1 // pred_check
      _
    $region15: #{tpu_custom_call.1} parent=1 // pred_check_branch
      %54 = sbr.rel (0) target = $region17
    $region16: #{tpu_custom_call.1} parent=1 // pred_region
      %s56 = ssub.s32 16384, 16384
      %57 = vsyncadd [#allocation9], %s56
      %s58 = sshll.u32 [#allocation8], 4
      %s59 = int_to_ptr.vmem [resolvable:$true] %s58
      %64 = dma.hbm_to_vmem [thread:$0]  %s3, 16384, %s59, [#allocation9], 128, 128, 8
    $region17: #{tpu_custom_call.1} parent=1 // pred_fallthru
      _
    // Predicated region
    $region18: #{tpu_custom_call.1} parent=1 // pred_check
      _
    $region19: #{tpu_custom_call.1} parent=1 // pred_check_branch
      %66 = sbr.rel (0) target = $region21
    $region20: #{tpu_custom_call.1} parent=1 // pred_region
      _
    $region21: #{tpu_custom_call.1} parent=1 // pred_fallthru
      _
    // Predicated region
    $region22: #{tpu_custom_call.1} parent=1 // pred_check
      _
    $region23: #{tpu_custom_call.1} parent=1 // pred_check_branch
      %68 = sbr.rel (0) target = $region25
    $region24: #{tpu_custom_call.1} parent=1 // pred_region
      %s70 = ssub.s32 8192, 8192
      %71 = vsyncadd [#allocation9], %s70
      %s72 = sshll.u32 [#allocation10], 4
      %s73 = int_to_ptr.vmem [resolvable:$true] %s72
      %78 = dma.hbm_to_vmem [thread:$0]  %s5, 8192, %s73, [#allocation9], 256, 256, 16
    $region25: #{tpu_custom_call.1} parent=1 // pred_fallthru
      _
    // Predicated region
    $region26: #{tpu_custom_call.1} parent=1 // pred_check
      _
    $region27: #{tpu_custom_call.1} parent=1 // pred_check_branch
      %80 = sbr.rel (0) target = $region29
    $region28: #{tpu_custom_call.1} parent=1 // pred_region
      _
    $region29: #{tpu_custom_call.1} parent=1 // pred_fallthru
      _
    // Predicated region
    $region30: #{tpu_custom_call.1} parent=1 // pred_check
      _
    $region31: #{tpu_custom_call.1} parent=1 // pred_check_branch
      %82 = sbr.rel (0) target = $region33
    $region32: #{tpu_custom_call.1} parent=1 // pred_region
      %s84 = ssub.s32 4096, 4096
      %85 = vsyncadd [#allocation12], %s84
      %s86 = sshll.u32 [#allocation11], 4
      %s87 = int_to_ptr.vmem [resolvable:$true] %s86
      %92 = dma.hbm_to_vmem [thread:$0]  %s7, 4096, %s87, [#allocation12], 64, 64, 4
    $region33: #{tpu_custom_call.1} parent=1 // pred_fallthru
      _
    // Predicated region
    $region34: #{tpu_custom_call.1} parent=1 // pred_check
      _
    $region35: #{tpu_custom_call.1} parent=1 // pred_check_branch
      %94 = sbr.rel (0) target = $region37
    $region36: #{tpu_custom_call.1} parent=1 // pred_region
      _
    $region37: #{tpu_custom_call.1} parent=1 // pred_fallthru
      _
    // Predicated region
    $region38: #{tpu_custom_call.1} parent=1 // pred_check
      _
    $region39: #{tpu_custom_call.1} parent=1 // pred_check_branch
      %96 = sbr.rel (0) target = $region41
    $region40: #{tpu_custom_call.1} parent=1 // pred_region
      %97 = dma.done [#allocation3], 128
    $region41: #{tpu_custom_call.1} parent=1 // pred_fallthru
      _
    // Predicated region
    $region42: #{tpu_custom_call.1} parent=1 // pred_check
      _
    $region43: #{tpu_custom_call.1} parent=1 // pred_check_branch
      %99 = sbr.rel (0) target = $region45
    $region44: #{tpu_custom_call.1} parent=1 // pred_region
      %100 = dma.done [#allocation6], 8192
    $region45: #{tpu_custom_call.1} parent=1 // pred_fallthru
      _
    // Predicated region
    $region46: #{tpu_custom_call.1} parent=1 // pred_check
      _
    $region47: #{tpu_custom_call.1} parent=1 // pred_check_branch
      %102 = sbr.rel (0) target = $region49
    $region48: #{tpu_custom_call.1} parent=1 // pred_region
      %103 = dma.done [#allocation6], 128
    $region49: #{tpu_custom_call.1} parent=1 // pred_fallthru
      _
    // Predicated region
    $region50: #{tpu_custom_call.1} parent=1 // pred_check
      _
    $region51: #{tpu_custom_call.1} parent=1 // pred_check_branch
      %105 = sbr.rel (0) target = $region53
    $region52: #{tpu_custom_call.1} parent=1 // pred_region
      %106 = dma.done [#allocation9], 16384
    $region53: #{tpu_custom_call.1} parent=1 // pred_fallthru
      _
    // Predicated region
    $region54: #{tpu_custom_call.1} parent=1 // pred_check
      _
    $region55: #{tpu_custom_call.1} parent=1 // pred_check_branch
      %108 = sbr.rel (0) target = $region57
    $region56: #{tpu_custom_call.1} parent=1 // pred_region
      %109 = dma.done [#allocation9], 8192
    $region57: #{tpu_custom_call.1} parent=1 // pred_fallthru
      _
    // Predicated region
    $region58: #{tpu_custom_call.1} parent=1 // pred_check
      _
    $region59: #{tpu_custom_call.1} parent=1 // pred_check_branch
      %111 = sbr.rel (0) target = $region61
    $region60: #{tpu_custom_call.1} parent=1 // pred_region
      %112 = dma.done [#allocation12], 4096
    $region61: #{tpu_custom_call.1} parent=1 // pred_fallthru
      _
    %v114 = vld [vmem:[#allocation2] sm:$0xf]
    %v115 = vld [vmem:[#allocation2 + $0x4] sm:$0xf]
    %v116 = vld [vmem:[#allocation5] sm:$0xff]
    %v117 = vld [vmem:[#allocation5 + $0x8] sm:$0xff]
    %v118 = vld [vmem:[#allocation5 + $0x10] sm:$0xff]
    %v119 = vld [vmem:[#allocation5 + $0x18] sm:$0xff]
    %v120 = vld [vmem:[#allocation5 + $0x20] sm:$0xff]
    %v121 = vld [vmem:[#allocation5 + $0x28] sm:$0xff]
    %v122 = vld [vmem:[#allocation5 + $0x30] sm:$0xff]
    %v123 = vld [vmem:[#allocation5 + $0x38] sm:$0xff]
    %v124 = vld [vmem:[#allocation5 + $0x40] sm:$0xff]
    %v125 = vld [vmem:[#allocation5 + $0x48] sm:$0xff]
    %v126 = vld [vmem:[#allocation5 + $0x50] sm:$0xff]
    %v127 = vld [vmem:[#allocation5 + $0x58] sm:$0xff]
    %v128 = vld [vmem:[#allocation5 + $0x60] sm:$0xff]
    %v129 = vld [vmem:[#allocation5 + $0x68] sm:$0xff]
    %v130 = vld [vmem:[#allocation5 + $0x70] sm:$0xff]
    %v131 = vld [vmem:[#allocation5 + $0x78] sm:$0xff]
    %v132 = vld [vmem:[#allocation5 + $0x80] sm:$0xff]
    %v133 = vld [vmem:[#allocation5 + $0x88] sm:$0xff]
    %v134 = vld [vmem:[#allocation5 + $0x90] sm:$0xff]
    %v135 = vld [vmem:[#allocation5 + $0x98] sm:$0xff]
    %v136 = vld [vmem:[#allocation5 + $0xa0] sm:$0xff]
    %v137 = vld [vmem:[#allocation5 + $0xa8] sm:$0xff]
    %v138 = vld [vmem:[#allocation5 + $0xb0] sm:$0xff]
    %v139 = vld [vmem:[#allocation5 + $0xb8] sm:$0xff]
    %v140 = vld [vmem:[#allocation5 + $0xc0] sm:$0xff]
    %v141 = vld [vmem:[#allocation5 + $0xc8] sm:$0xff]
    %v142 = vld [vmem:[#allocation5 + $0xd0] sm:$0xff]
    %v143 = vld [vmem:[#allocation5 + $0xd8] sm:$0xff]
    %v144 = vld [vmem:[#allocation5 + $0xe0] sm:$0xff]
    %v145 = vld [vmem:[#allocation5 + $0xe8] sm:$0xff]
    %v146 = vld [vmem:[#allocation5 + $0xf0] sm:$0xff]
    %v147 = vld [vmem:[#allocation5 + $0xf8] sm:$0xff]
    %v148 = vld [vmem:[#allocation5 + $0x100] sm:$0xff]
    %v149 = vld [vmem:[#allocation5 + $0x108] sm:$0xff]
    %v150 = vld [vmem:[#allocation5 + $0x110] sm:$0xff]
    %v151 = vld [vmem:[#allocation5 + $0x118] sm:$0xff]
    %v152 = vld [vmem:[#allocation5 + $0x120] sm:$0xff]
    %v153 = vld [vmem:[#allocation5 + $0x128] sm:$0xff]
    %v154 = vld [vmem:[#allocation5 + $0x130] sm:$0xff]
    %v155 = vld [vmem:[#allocation5 + $0x138] sm:$0xff]
    %v156 = vld [vmem:[#allocation5 + $0x140] sm:$0xff]
    %v157 = vld [vmem:[#allocation5 + $0x148] sm:$0xff]
    %v158 = vld [vmem:[#allocation5 + $0x150] sm:$0xff]
    %v159 = vld [vmem:[#allocation5 + $0x158] sm:$0xff]
    %v160 = vld [vmem:[#allocation5 + $0x160] sm:$0xff]
    %v161 = vld [vmem:[#allocation5 + $0x168] sm:$0xff]
    %v162 = vld [vmem:[#allocation5 + $0x170] sm:$0xff]
    %v163 = vld [vmem:[#allocation5 + $0x178] sm:$0xff]
    %v164 = vld [vmem:[#allocation5 + $0x180] sm:$0xff]
    %v165 = vld [vmem:[#allocation5 + $0x188] sm:$0xff]
    %v166 = vld [vmem:[#allocation5 + $0x190] sm:$0xff]
    %v167 = vld [vmem:[#allocation5 + $0x198] sm:$0xff]
    %v168 = vld [vmem:[#allocation5 + $0x1a0] sm:$0xff]
    %v169 = vld [vmem:[#allocation5 + $0x1a8] sm:$0xff]
    %v170 = vld [vmem:[#allocation5 + $0x1b0] sm:$0xff]
    %v171 = vld [vmem:[#allocation5 + $0x1b8] sm:$0xff]
    %v172 = vld [vmem:[#allocation5 + $0x1c0] sm:$0xff]
    %v173 = vld [vmem:[#allocation5 + $0x1c8] sm:$0xff]
    %v174 = vld [vmem:[#allocation5 + $0x1d0] sm:$0xff]
    %v175 = vld [vmem:[#allocation5 + $0x1d8] sm:$0xff]
    %v176 = vld [vmem:[#allocation5 + $0x1e0] sm:$0xff]
    %v177 = vld [vmem:[#allocation5 + $0x1e8] sm:$0xff]
    %v178 = vld [vmem:[#allocation5 + $0x1f0] sm:$0xff]
    %v179 = vld [vmem:[#allocation5 + $0x1f8] sm:$0xff]
    %v180 = vld [vmem:[#allocation7] sm:$0xff]
    %v182 = vlaneseq
    %v183 = vshrl.u32 %v182, 7
    %v184 = vsub.s32 0, %v183
    %v185 = vrot.slane %v180, %v184
    %v186 = vlaneseq
    %v187 = vshrl.u32 %v186, 7
    %v188 = vsub.s32 1, %v187
    %v189 = vrot.slane %v180, %v188
    %v190 = vlaneseq
    %v191 = vshrl.u32 %v190, 7
    %v192 = vsub.s32 2, %v191
    %v193 = vrot.slane %v180, %v192
    %v194 = vlaneseq
    %v195 = vshrl.u32 %v194, 7
    %v196 = vsub.s32 3, %v195
    %v197 = vrot.slane %v180, %v196
    %v198 = vlaneseq
    %v199 = vshrl.u32 %v198, 7
    %v200 = vsub.s32 4, %v199
    %v201 = vrot.slane %v180, %v200
    %v202 = vlaneseq
    %v203 = vshrl.u32 %v202, 7
    %v204 = vsub.s32 5, %v203
    %v205 = vrot.slane %v180, %v204
    %v206 = vlaneseq
    %v207 = vshrl.u32 %v206, 7
    %v208 = vsub.s32 6, %v207
    %v209 = vrot.slane %v180, %v208
    %v210 = vlaneseq
    %v211 = vshrl.u32 %v210, 7
    %v212 = vsub.s32 7, %v211
    %v213 = vrot.slane %v180, %v212
    %v224 = vunpack.c.l.b16 %v114
    %v225 = vunpack.c.l.b16 %v115
    %v226 = vpack.c.b16 %v225, %v224
    %v292 = vunpack.c.l.b16 %v116
    %v293 = vunpack.c.h.b16 %v116
    %v294 = vunpack.c.l.b16 %v117
    %v295 = vunpack.c.h.b16 %v117
    %v296 = vunpack.c.l.b16 %v118
    %v297 = vunpack.c.h.b16 %v118
    %v298 = vunpack.c.l.b16 %v119
    %v299 = vunpack.c.h.b16 %v119
    %v300 = vunpack.c.l.b16 %v120
    %v301 = vunpack.c.h.b16 %v120
    %v302 = vunpack.c.l.b16 %v121
    %v303 = vunpack.c.h.b16 %v121
    %v304 = vunpack.c.l.b16 %v122
    %v305 = vunpack.c.h.b16 %v122
    %v306 = vunpack.c.l.b16 %v123
    %v307 = vunpack.c.h.b16 %v123
    %v308 = vunpack.c.l.b16 %v124
    %v309 = vunpack.c.h.b16 %v124
    %v310 = vunpack.c.l.b16 %v125
    %v311 = vunpack.c.h.b16 %v125
    %v312 = vunpack.c.l.b16 %v126
    %v313 = vunpack.c.h.b16 %v126
    %v314 = vunpack.c.l.b16 %v127
    %v315 = vunpack.c.h.b16 %v127
    %v316 = vunpack.c.l.b16 %v128
    %v317 = vunpack.c.h.b16 %v128
    %v318 = vunpack.c.l.b16 %v129
    %v319 = vunpack.c.h.b16 %v129
    %v320 = vunpack.c.l.b16 %v130
    %v321 = vunpack.c.h.b16 %v130
    %v322 = vunpack.c.l.b16 %v131
    %v323 = vunpack.c.h.b16 %v131
    %v324 = vunpack.c.l.b16 %v132
    %v325 = vunpack.c.h.b16 %v132
    %v326 = vunpack.c.l.b16 %v133
    %v327 = vunpack.c.h.b16 %v133
    %v328 = vunpack.c.l.b16 %v134
    %v329 = vunpack.c.h.b16 %v134
    %v330 = vunpack.c.l.b16 %v135
    %v331 = vunpack.c.h.b16 %v135
    %v332 = vunpack.c.l.b16 %v136
    %v333 = vunpack.c.h.b16 %v136
    %v334 = vunpack.c.l.b16 %v137
    %v335 = vunpack.c.h.b16 %v137
    %v336 = vunpack.c.l.b16 %v138
    %v337 = vunpack.c.h.b16 %v138
    %v338 = vunpack.c.l.b16 %v139
    %v339 = vunpack.c.h.b16 %v139
    %v340 = vunpack.c.l.b16 %v140
    %v341 = vunpack.c.h.b16 %v140
    %v342 = vunpack.c.l.b16 %v141
    %v343 = vunpack.c.h.b16 %v141
    %v344 = vunpack.c.l.b16 %v142
    %v345 = vunpack.c.h.b16 %v142
    %v346 = vunpack.c.l.b16 %v143
    %v347 = vunpack.c.h.b16 %v143
    %v348 = vunpack.c.l.b16 %v144
    %v349 = vunpack.c.h.b16 %v144
    %v350 = vunpack.c.l.b16 %v145
    %v351 = vunpack.c.h.b16 %v145
    %v352 = vunpack.c.l.b16 %v146
    %v353 = vunpack.c.h.b16 %v146
    %v354 = vunpack.c.l.b16 %v147
    %v355 = vunpack.c.h.b16 %v147
    %v356 = vunpack.c.l.b16 %v148
    %v357 = vunpack.c.h.b16 %v148
    %v358 = vunpack.c.l.b16 %v149
    %v359 = vunpack.c.h.b16 %v149
    %v360 = vunpack.c.l.b16 %v150
    %v361 = vunpack.c.h.b16 %v150
    %v362 = vunpack.c.l.b16 %v151
    %v363 = vunpack.c.h.b16 %v151
    %v364 = vunpack.c.l.b16 %v152
    %v365 = vunpack.c.h.b16 %v152
    %v366 = vunpack.c.l.b16 %v153
    %v367 = vunpack.c.h.b16 %v153
    %v368 = vunpack.c.l.b16 %v154
    %v369 = vunpack.c.h.b16 %v154
    %v370 = vunpack.c.l.b16 %v155
    %v371 = vunpack.c.h.b16 %v155
    %v372 = vunpack.c.l.b16 %v156
    %v373 = vunpack.c.h.b16 %v156
    %v374 = vunpack.c.l.b16 %v157
    %v375 = vunpack.c.h.b16 %v157
    %v376 = vunpack.c.l.b16 %v158
    %v377 = vunpack.c.h.b16 %v158
    %v378 = vunpack.c.l.b16 %v159
    %v379 = vunpack.c.h.b16 %v159
    %v380 = vunpack.c.l.b16 %v160
    %v381 = vunpack.c.h.b16 %v160
    %v382 = vunpack.c.l.b16 %v161
    %v383 = vunpack.c.h.b16 %v161
    %v384 = vunpack.c.l.b16 %v162
    %v385 = vunpack.c.h.b16 %v162
    %v386 = vunpack.c.l.b16 %v163
    %v387 = vunpack.c.h.b16 %v163
    %v388 = vunpack.c.l.b16 %v164
    %v389 = vunpack.c.h.b16 %v164
    %v390 = vunpack.c.l.b16 %v165
    %v391 = vunpack.c.h.b16 %v165
    %v392 = vunpack.c.l.b16 %v166
    %v393 = vunpack.c.h.b16 %v166
    %v394 = vunpack.c.l.b16 %v167
    %v395 = vunpack.c.h.b16 %v167
    %v396 = vunpack.c.l.b16 %v168
    %v397 = vunpack.c.h.b16 %v168
    %v398 = vunpack.c.l.b16 %v169
    %v399 = vunpack.c.h.b16 %v169
    %v400 = vunpack.c.l.b16 %v170
    %v401 = vunpack.c.h.b16 %v170
    %v402 = vunpack.c.l.b16 %v171
    %v403 = vunpack.c.h.b16 %v171
    %v404 = vunpack.c.l.b16 %v172
    %v405 = vunpack.c.h.b16 %v172
    %v406 = vunpack.c.l.b16 %v173
    %v407 = vunpack.c.h.b16 %v173
    %v408 = vunpack.c.l.b16 %v174
    %v409 = vunpack.c.h.b16 %v174
    %v410 = vunpack.c.l.b16 %v175
    %v411 = vunpack.c.h.b16 %v175
    %v412 = vunpack.c.l.b16 %v176
    %v413 = vunpack.c.h.b16 %v176
    %v414 = vunpack.c.l.b16 %v177
    %v415 = vunpack.c.h.b16 %v177
    %v416 = vunpack.c.l.b16 %v178
    %v417 = vunpack.c.h.b16 %v178
    %v418 = vunpack.c.l.b16 %v179
    %v419 = vunpack.c.h.b16 %v179
    %v420 = vpack.c.b16 %v300, %v292
    %v421 = vpack.c.b16 %v301, %v293
    %v422 = vpack.c.b16 %v302, %v294
    %v423 = vpack.c.b16 %v303, %v295
    %v424 = vpack.c.b16 %v304, %v296
    %v425 = vpack.c.b16 %v305, %v297
    %v426 = vpack.c.b16 %v306, %v298
    %v427 = vpack.c.b16 %v307, %v299
    %v428 = vpack.c.b16 %v316, %v308
    %v429 = vpack.c.b16 %v317, %v309
    %v430 = vpack.c.b16 %v318, %v310
    %v431 = vpack.c.b16 %v319, %v311
    %v432 = vpack.c.b16 %v320, %v312
    %v433 = vpack.c.b16 %v321, %v313
    %v434 = vpack.c.b16 %v322, %v314
    %v435 = vpack.c.b16 %v323, %v315
    %v436 = vpack.c.b16 %v332, %v324
    %v437 = vpack.c.b16 %v333, %v325
    %v438 = vpack.c.b16 %v334, %v326
    %v439 = vpack.c.b16 %v335, %v327
    %v440 = vpack.c.b16 %v336, %v328
    %v441 = vpack.c.b16 %v337, %v329
    %v442 = vpack.c.b16 %v338, %v330
    %v443 = vpack.c.b16 %v339, %v331
    %v444 = vpack.c.b16 %v348, %v340
    %v445 = vpack.c.b16 %v349, %v341
    %v446 = vpack.c.b16 %v350, %v342
    %v447 = vpack.c.b16 %v351, %v343
    %v448 = vpack.c.b16 %v352, %v344
    %v449 = vpack.c.b16 %v353, %v345
    %v450 = vpack.c.b16 %v354, %v346
    %v451 = vpack.c.b16 %v355, %v347
    %v452 = vpack.c.b16 %v364, %v356
    %v453 = vpack.c.b16 %v365, %v357
    %v454 = vpack.c.b16 %v366, %v358
    %v455 = vpack.c.b16 %v367, %v359
    %v456 = vpack.c.b16 %v368, %v360
    %v457 = vpack.c.b16 %v369, %v361
    %v458 = vpack.c.b16 %v370, %v362
    %v459 = vpack.c.b16 %v371, %v363
    %v460 = vpack.c.b16 %v380, %v372
    %v461 = vpack.c.b16 %v381, %v373
    %v462 = vpack.c.b16 %v382, %v374
    %v463 = vpack.c.b16 %v383, %v375
    %v464 = vpack.c.b16 %v384, %v376
    %v465 = vpack.c.b16 %v385, %v377
    %v466 = vpack.c.b16 %v386, %v378
    %v467 = vpack.c.b16 %v387, %v379
    %v468 = vpack.c.b16 %v396, %v388
    %v469 = vpack.c.b16 %v397, %v389
    %v470 = vpack.c.b16 %v398, %v390
    %v471 = vpack.c.b16 %v399, %v391
    %v472 = vpack.c.b16 %v400, %v392
    %v473 = vpack.c.b16 %v401, %v393
    %v474 = vpack.c.b16 %v402, %v394
    %v475 = vpack.c.b16 %v403, %v395
    %v476 = vpack.c.b16 %v412, %v404
    %v477 = vpack.c.b16 %v413, %v405
    %v478 = vpack.c.b16 %v414, %v406
    %v479 = vpack.c.b16 %v415, %v407
    %v480 = vpack.c.b16 %v416, %v408
    %v481 = vpack.c.b16 %v417, %v409
    %v482 = vpack.c.b16 %v418, %v410
    %v483 = vpack.c.b16 %v419, %v411
    %548 = vmatprep.subr.bf16.mxu0 %v421
    %549 = vmatpush1.bf16.msra.mxu0 %v420
    %550 = vmatprep.subr.bf16.mxu0 %v429
    %551 = vmatpush1.bf16.msra.mxu0 %v428
    %552 = vmatprep.subr.bf16.mxu0 %v437
    %553 = vmatpush1.bf16.msra.mxu0 %v436
    %554 = vmatprep.subr.bf16.mxu0 %v445
    %555 = vmatpush1.bf16.msra.mxu0 %v444
    %556 = vmatprep.subr.bf16.mxu0 %v453
    %557 = vmatpush1.bf16.msra.mxu0 %v452
    %558 = vmatprep.subr.bf16.mxu0 %v461
    %559 = vmatpush1.bf16.msra.mxu0 %v460
    %560 = vmatprep.subr.bf16.mxu0 %v469
    %561 = vmatpush1.bf16.msra.mxu0 %v468
    %562 = vmatprep.subr.bf16.mxu0 %v477
    %563 = vmatpush1.bf16.msra.mxu0 %v476
    %564 = vmatprep.subr.bf16.mxu0 0
    %565 = vmatpush1.bf16.msra.mxu0 0
    %566 = vmatprep.subr.bf16.mxu0 0
    %567 = vmatpush1.bf16.msra.mxu0 0
    %568 = vmatprep.subr.bf16.mxu0 0
    %569 = vmatpush1.bf16.msra.mxu0 0
    %570 = vmatprep.subr.bf16.mxu0 0
    %571 = vmatpush1.bf16.msra.mxu0 0
    %572 = vmatprep.subr.bf16.mxu0 0
    %573 = vmatpush1.bf16.msra.mxu0 0
    %574 = vmatprep.subr.bf16.mxu0 0
    %575 = vmatpush1.bf16.msra.mxu0 0
    %576 = vmatprep.subr.bf16.mxu0 0
    %577 = vmatpush1.bf16.msra.mxu0 0
    %578 = vmatprep.subr.bf16.mxu0 0
    %579 = vmatpush1.bf16.msra.mxu0 0
    %580 = vmatprep.mubr.bf16.mxu0 0
    %581 = vmatmul.mubr.bf16.gmra.mrb[0].mxu0 %v226
    %v582 = vpop.f32.mrb[0].mxu0
    %v583 = vadd.f32 %v185, %v582
    %v584 = vpop.f32.mrb[0].mxu0
    %v585 = vadd.f32 %v189, %v584
    %v586 = vpop.f32.mrb[0].mxu0
    %v587 = vadd.f32 %v185, %v586
    %v588 = vpop.f32.mrb[0].mxu0
    %v589 = vadd.f32 %v189, %v588
    %590 = vdwg.mxu0
    %591 = vmatprep.subr.bf16.mxu0 %v423
    %592 = vmatpush1.bf16.msra.mxu0 %v422
    %593 = vmatprep.subr.bf16.mxu0 %v431
    %594 = vmatpush1.bf16.msra.mxu0 %v430
    %595 = vmatprep.subr.bf16.mxu0 %v439
    %596 = vmatpush1.bf16.msra.mxu0 %v438
    %597 = vmatprep.subr.bf16.mxu0 %v447
    %598 = vmatpush1.bf16.msra.mxu0 %v446
    %599 = vmatprep.subr.bf16.mxu0 %v455
    %600 = vmatpush1.bf16.msra.mxu0 %v454
    %601 = vmatprep.subr.bf16.mxu0 %v463
    %602 = vmatpush1.bf16.msra.mxu0 %v462
    %603 = vmatprep.subr.bf16.mxu0 %v471
    %604 = vmatpush1.bf16.msra.mxu0 %v470
    %605 = vmatprep.subr.bf16.mxu0 %v479
    %606 = vmatpush1.bf16.msra.mxu0 %v478
    %607 = vmatprep.subr.bf16.mxu0 0
    %608 = vmatpush1.bf16.msra.mxu0 0
    %609 = vmatprep.subr.bf16.mxu0 0
    %610 = vmatpush1.bf16.msra.mxu0 0
    %611 = vmatprep.subr.bf16.mxu0 0
    %612 = vmatpush1.bf16.msra.mxu0 0
    %613 = vmatprep.subr.bf16.mxu0 0
    %614 = vmatpush1.bf16.msra.mxu0 0
    %615 = vmatprep.subr.bf16.mxu0 0
    %616 = vmatpush1.bf16.msra.mxu0 0
    %617 = vmatprep.subr.bf16.mxu0 0
    %618 = vmatpush1.bf16.msra.mxu0 0
    %619 = vmatprep.subr.bf16.mxu0 0
    %620 = vmatpush1.bf16.msra.mxu0 0
    %621 = vmatprep.subr.bf16.mxu0 0
    %622 = vmatpush1.bf16.msra.mxu0 0
    %623 = vmatprep.mubr.bf16.mxu0 0
    %624 = vmatmul.mubr.bf16.gmra.mrb[0].mxu0 %v226
    %v625 = vpop.f32.mrb[0].mxu0
    %v626 = vadd.f32 %v193, %v625
    %v627 = vpop.f32.mrb[0].mxu0
    %v628 = vadd.f32 %v197, %v627
    %v629 = vpop.f32.mrb[0].mxu0
    %v630 = vadd.f32 %v193, %v629
    %v631 = vpop.f32.mrb[0].mxu0
    %v632 = vadd.f32 %v197, %v631
    %633 = vdwg.mxu0
    %634 = vmatprep.subr.bf16.mxu0 %v425
    %635 = vmatpush1.bf16.msra.mxu0 %v424
    %636 = vmatprep.subr.bf16.mxu0 %v433
    %637 = vmatpush1.bf16.msra.mxu0 %v432
    %638 = vmatprep.subr.bf16.mxu0 %v441
    %639 = vmatpush1.bf16.msra.mxu0 %v440
    %640 = vmatprep.subr.bf16.mxu0 %v449
    %641 = vmatpush1.bf16.msra.mxu0 %v448
    %642 = vmatprep.subr.bf16.mxu0 %v457
    %643 = vmatpush1.bf16.msra.mxu0 %v456
    %644 = vmatprep.subr.bf16.mxu0 %v465
    %645 = vmatpush1.bf16.msra.mxu0 %v464
    %646 = vmatprep.subr.bf16.mxu0 %v473
    %647 = vmatpush1.bf16.msra.mxu0 %v472
    %648 = vmatprep.subr.bf16.mxu0 %v481
    %649 = vmatpush1.bf16.msra.mxu0 %v480
    %650 = vmatprep.subr.bf16.mxu0 0
    %651 = vmatpush1.bf16.msra.mxu0 0
    %652 = vmatprep.subr.bf16.mxu0 0
    %653 = vmatpush1.bf16.msra.mxu0 0
    %654 = vmatprep.subr.bf16.mxu0 0
    %655 = vmatpush1.bf16.msra.mxu0 0
    %656 = vmatprep.subr.bf16.mxu0 0
    %657 = vmatpush1.bf16.msra.mxu0 0
    %658 = vmatprep.subr.bf16.mxu0 0
    %659 = vmatpush1.bf16.msra.mxu0 0
    %660 = vmatprep.subr.bf16.mxu0 0
    %661 = vmatpush1.bf16.msra.mxu0 0
    %662 = vmatprep.subr.bf16.mxu0 0
    %663 = vmatpush1.bf16.msra.mxu0 0
    %664 = vmatprep.subr.bf16.mxu0 0
    %665 = vmatpush1.bf16.msra.mxu0 0
    %666 = vmatprep.mubr.bf16.mxu0 0
    %667 = vmatmul.mubr.bf16.gmra.mrb[0].mxu0 %v226
    %v668 = vpop.f32.mrb[0].mxu0
    %v669 = vadd.f32 %v201, %v668
    %v670 = vpop.f32.mrb[0].mxu0
    %v671 = vadd.f32 %v205, %v670
    %v672 = vpop.f32.mrb[0].mxu0
    %v673 = vadd.f32 %v201, %v672
    %v674 = vpop.f32.mrb[0].mxu0
    %v675 = vadd.f32 %v205, %v674
    %676 = vdwg.mxu0
    %677 = vmatprep.subr.bf16.mxu0 %v427
    %678 = vmatpush1.bf16.msra.mxu0 %v426
    %679 = vmatprep.subr.bf16.mxu0 %v435
    %680 = vmatpush1.bf16.msra.mxu0 %v434
    %681 = vmatprep.subr.bf16.mxu0 %v443
    %682 = vmatpush1.bf16.msra.mxu0 %v442
    %683 = vmatprep.subr.bf16.mxu0 %v451
    %684 = vmatpush1.bf16.msra.mxu0 %v450
    %685 = vmatprep.subr.bf16.mxu0 %v459
    %686 = vmatpush1.bf16.msra.mxu0 %v458
    %687 = vmatprep.subr.bf16.mxu0 %v467
    %688 = vmatpush1.bf16.msra.mxu0 %v466
    %689 = vmatprep.subr.bf16.mxu0 %v475
    %690 = vmatpush1.bf16.msra.mxu0 %v474
    %691 = vmatprep.subr.bf16.mxu0 %v483
    %692 = vmatpush1.bf16.msra.mxu0 %v482
    %693 = vmatprep.subr.bf16.mxu0 0
    %694 = vmatpush1.bf16.msra.mxu0 0
    %695 = vmatprep.subr.bf16.mxu0 0
    %696 = vmatpush1.bf16.msra.mxu0 0
    %697 = vmatprep.subr.bf16.mxu0 0
    %698 = vmatpush1.bf16.msra.mxu0 0
    %699 = vmatprep.subr.bf16.mxu0 0
    %700 = vmatpush1.bf16.msra.mxu0 0
    %701 = vmatprep.subr.bf16.mxu0 0
    %702 = vmatpush1.bf16.msra.mxu0 0
    %703 = vmatprep.subr.bf16.mxu0 0
    %704 = vmatpush1.bf16.msra.mxu0 0
    %705 = vmatprep.subr.bf16.mxu0 0
    %706 = vmatpush1.bf16.msra.mxu0 0
    %707 = vmatprep.subr.bf16.mxu0 0
    %708 = vmatpush1.bf16.msra.mxu0 0
    %709 = vmatprep.mubr.bf16.mxu0 0
    %710 = vmatmul.mubr.bf16.gmra.mrb[0].mxu0 %v226
    %v711 = vpop.f32.mrb[0].mxu0
    %v712 = vadd.f32 %v209, %v711
    %v713 = vpop.f32.mrb[0].mxu0
    %v714 = vadd.f32 %v213, %v713
    %v715 = vpop.f32.mrb[0].mxu0
    %v716 = vadd.f32 %v209, %v715
    %v717 = vpop.f32.mrb[0].mxu0
    %v718 = vadd.f32 %v213, %v717
    %719 = vdwg.mxu0
    %v720 = vmax.f32 %v583, 0.0
    %v721 = vmax.f32 %v585, 0.0
    %v722 = vmax.f32 %v626, 0.0
    %v723 = vmax.f32 %v628, 0.0
    %v724 = vmax.f32 %v669, 0.0
    %v725 = vmax.f32 %v671, 0.0
    %v726 = vmax.f32 %v712, 0.0
    %v727 = vmax.f32 %v714, 0.0
    %v728 = vmax.f32 %v587, 0.0
    %v729 = vmax.f32 %v589, 0.0
    %v730 = vmax.f32 %v630, 0.0
    %v731 = vmax.f32 %v632, 0.0
    %v732 = vmax.f32 %v673, 0.0
    %v733 = vmax.f32 %v675, 0.0
    %v734 = vmax.f32 %v716, 0.0
    %v735 = vmax.f32 %v718, 0.0
    %v736 = vpack.c.bf16 %v728, %v720
    %v737 = vpack.c.bf16 %v729, %v721
    %v738 = vpack.c.bf16 %v730, %v722
    %v739 = vpack.c.bf16 %v731, %v723
    %v740 = vpack.c.bf16 %v732, %v724
    %v741 = vpack.c.bf16 %v733, %v725
    %v742 = vpack.c.bf16 %v734, %v726
    %v743 = vpack.c.bf16 %v735, %v727
    %v744 = vld [vmem:[#allocation8] sm:$0xff]
    %v745 = vld [vmem:[#allocation8 + $0x8] sm:$0xff]
    %v746 = vld [vmem:[#allocation8 + $0x10] sm:$0xff]
    %v747 = vld [vmem:[#allocation8 + $0x18] sm:$0xff]
    %v748 = vld [vmem:[#allocation8 + $0x20] sm:$0xff]
    %v749 = vld [vmem:[#allocation8 + $0x28] sm:$0xff]
    %v750 = vld [vmem:[#allocation8 + $0x30] sm:$0xff]
    %v751 = vld [vmem:[#allocation8 + $0x38] sm:$0xff]
    %v752 = vld [vmem:[#allocation8 + $0x40] sm:$0xff]
    %v753 = vld [vmem:[#allocation8 + $0x48] sm:$0xff]
    %v754 = vld [vmem:[#allocation8 + $0x50] sm:$0xff]
    %v755 = vld [vmem:[#allocation8 + $0x58] sm:$0xff]
    %v756 = vld [vmem:[#allocation8 + $0x60] sm:$0xff]
    %v757 = vld [vmem:[#allocation8 + $0x68] sm:$0xff]
    %v758 = vld [vmem:[#allocation8 + $0x70] sm:$0xff]
    %v759 = vld [vmem:[#allocation8 + $0x78] sm:$0xff]
    %v760 = vld [vmem:[#allocation8 + $0x80] sm:$0xff]
    %v761 = vld [vmem:[#allocation8 + $0x88] sm:$0xff]
    %v762 = vld [vmem:[#allocation8 + $0x90] sm:$0xff]
    %v763 = vld [vmem:[#allocation8 + $0x98] sm:$0xff]
    %v764 = vld [vmem:[#allocation8 + $0xa0] sm:$0xff]
    %v765 = vld [vmem:[#allocation8 + $0xa8] sm:$0xff]
    %v766 = vld [vmem:[#allocation8 + $0xb0] sm:$0xff]
    %v767 = vld [vmem:[#allocation8 + $0xb8] sm:$0xff]
    %v768 = vld [vmem:[#allocation8 + $0xc0] sm:$0xff]
    %v769 = vld [vmem:[#allocation8 + $0xc8] sm:$0xff]
    %v770 = vld [vmem:[#allocation8 + $0xd0] sm:$0xff]
    %v771 = vld [vmem:[#allocation8 + $0xd8] sm:$0xff]
    %v772 = vld [vmem:[#allocation8 + $0xe0] sm:$0xff]
    %v773 = vld [vmem:[#allocation8 + $0xe8] sm:$0xff]
    %v774 = vld [vmem:[#allocation8 + $0xf0] sm:$0xff]
    %v775 = vld [vmem:[#allocation8 + $0xf8] sm:$0xff]
    %v776 = vld [vmem:[#allocation8 + $0x100] sm:$0xff]
    %v777 = vld [vmem:[#allocation8 + $0x108] sm:$0xff]
    %v778 = vld [vmem:[#allocation8 + $0x110] sm:$0xff]
    %v779 = vld [vmem:[#allocation8 + $0x118] sm:$0xff]
    %v780 = vld [vmem:[#allocation8 + $0x120] sm:$0xff]
    %v781 = vld [vmem:[#allocation8 + $0x128] sm:$0xff]
    %v782 = vld [vmem:[#allocation8 + $0x130] sm:$0xff]
    %v783 = vld [vmem:[#allocation8 + $0x138] sm:$0xff]
    %v784 = vld [vmem:[#allocation8 + $0x140] sm:$0xff]
    %v785 = vld [vmem:[#allocation8 + $0x148] sm:$0xff]
    %v786 = vld [vmem:[#allocation8 + $0x150] sm:$0xff]
    %v787 = vld [vmem:[#allocation8 + $0x158] sm:$0xff]
    %v788 = vld [vmem:[#allocation8 + $0x160] sm:$0xff]
    %v789 = vld [vmem:[#allocation8 + $0x168] sm:$0xff]
    %v790 = vld [vmem:[#allocation8 + $0x170] sm:$0xff]
    %v791 = vld [vmem:[#allocation8 + $0x178] sm:$0xff]
    %v792 = vld [vmem:[#allocation8 + $0x180] sm:$0xff]
    %v793 = vld [vmem:[#allocation8 + $0x188] sm:$0xff]
    %v794 = vld [vmem:[#allocation8 + $0x190] sm:$0xff]
    %v795 = vld [vmem:[#allocation8 + $0x198] sm:$0xff]
    %v796 = vld [vmem:[#allocation8 + $0x1a0] sm:$0xff]
    %v797 = vld [vmem:[#allocation8 + $0x1a8] sm:$0xff]
    %v798 = vld [vmem:[#allocation8 + $0x1b0] sm:$0xff]
    %v799 = vld [vmem:[#allocation8 + $0x1b8] sm:$0xff]
    %v800 = vld [vmem:[#allocation8 + $0x1c0] sm:$0xff]
    %v801 = vld [vmem:[#allocation8 + $0x1c8] sm:$0xff]
    %v802 = vld [vmem:[#allocation8 + $0x1d0] sm:$0xff]
    %v803 = vld [vmem:[#allocation8 + $0x1d8] sm:$0xff]
    %v804 = vld [vmem:[#allocation8 + $0x1e0] sm:$0xff]
    %v805 = vld [vmem:[#allocation8 + $0x1e8] sm:$0xff]
    %v806 = vld [vmem:[#allocation8 + $0x1f0] sm:$0xff]
    %v807 = vld [vmem:[#allocation8 + $0x1f8] sm:$0xff]
    %v808 = vld [vmem:[#allocation8 + $0x200] sm:$0xff]
    %v809 = vld [vmem:[#allocation8 + $0x208] sm:$0xff]
    %v810 = vld [vmem:[#allocation8 + $0x210] sm:$0xff]
    %v811 = vld [vmem:[#allocation8 + $0x218] sm:$0xff]
    %v812 = vld [vmem:[#allocation8 + $0x220] sm:$0xff]
    %v813 = vld [vmem:[#allocation8 + $0x228] sm:$0xff]
    %v814 = vld [vmem:[#allocation8 + $0x230] sm:$0xff]
    %v815 = vld [vmem:[#allocation8 + $0x238] sm:$0xff]
    %v816 = vld [vmem:[#allocation8 + $0x240] sm:$0xff]
    %v817 = vld [vmem:[#allocation8 + $0x248] sm:$0xff]
    %v818 = vld [vmem:[#allocation8 + $0x250] sm:$0xff]
    %v819 = vld [vmem:[#allocation8 + $0x258] sm:$0xff]
    %v820 = vld [vmem:[#allocation8 + $0x260] sm:$0xff]
    %v821 = vld [vmem:[#allocation8 + $0x268] sm:$0xff]
    %v822 = vld [vmem:[#allocation8 + $0x270] sm:$0xff]
    %v823 = vld [vmem:[#allocation8 + $0x278] sm:$0xff]
    %v824 = vld [vmem:[#allocation8 + $0x280] sm:$0xff]
    %v825 = vld [vmem:[#allocation8 + $0x288] sm:$0xff]
    %v826 = vld [vmem:[#allocation8 + $0x290] sm:$0xff]
    %v827 = vld [vmem:[#allocation8 + $0x298] sm:$0xff]
    %v828 = vld [vmem:[#allocation8 + $0x2a0] sm:$0xff]
    %v829 = vld [vmem:[#allocation8 + $0x2a8] sm:$0xff]
    %v830 = vld [vmem:[#allocation8 + $0x2b0] sm:$0xff]
    %v831 = vld [vmem:[#allocation8 + $0x2b8] sm:$0xff]
    %v832 = vld [vmem:[#allocation8 + $0x2c0] sm:$0xff]
    %v833 = vld [vmem:[#allocation8 + $0x2c8] sm:$0xff]
    %v834 = vld [vmem:[#allocation8 + $0x2d0] sm:$0xff]
    %v835 = vld [vmem:[#allocation8 + $0x2d8] sm:$0xff]
    %v836 = vld [vmem:[#allocation8 + $0x2e0] sm:$0xff]
    %v837 = vld [vmem:[#allocation8 + $0x2e8] sm:$0xff]
    %v838 = vld [vmem:[#allocation8 + $0x2f0] sm:$0xff]
    %v839 = vld [vmem:[#allocation8 + $0x2f8] sm:$0xff]
    %v840 = vld [vmem:[#allocation8 + $0x300] sm:$0xff]
    %v841 = vld [vmem:[#allocation8 + $0x308] sm:$0xff]
    %v842 = vld [vmem:[#allocation8 + $0x310] sm:$0xff]
    %v843 = vld [vmem:[#allocation8 + $0x318] sm:$0xff]
    %v844 = vld [vmem:[#allocation8 + $0x320] sm:$0xff]
    %v845 = vld [vmem:[#allocation8 + $0x328] sm:$0xff]
    %v846 = vld [vmem:[#allocation8 + $0x330] sm:$0xff]
    %v847 = vld [vmem:[#allocation8 + $0x338] sm:$0xff]
    %v848 = vld [vmem:[#allocation8 + $0x340] sm:$0xff]
    %v849 = vld [vmem:[#allocation8 + $0x348] sm:$0xff]
    %v850 = vld [vmem:[#allocation8 + $0x350] sm:$0xff]
    %v851 = vld [vmem:[#allocation8 + $0x358] sm:$0xff]
    %v852 = vld [vmem:[#allocation8 + $0x360] sm:$0xff]
    %v853 = vld [vmem:[#allocation8 + $0x368] sm:$0xff]
    %v854 = vld [vmem:[#allocation8 + $0x370] sm:$0xff]
    %v855 = vld [vmem:[#allocation8 + $0x378] sm:$0xff]
    %v856 = vld [vmem:[#allocation8 + $0x380] sm:$0xff]
    %v857 = vld [vmem:[#allocation8 + $0x388] sm:$0xff]
    %v858 = vld [vmem:[#allocation8 + $0x390] sm:$0xff]
    %v859 = vld [vmem:[#allocation8 + $0x398] sm:$0xff]
    %v860 = vld [vmem:[#allocation8 + $0x3a0] sm:$0xff]
    %v861 = vld [vmem:[#allocation8 + $0x3a8] sm:$0xff]
    %v862 = vld [vmem:[#allocation8 + $0x3b0] sm:$0xff]
    %v863 = vld [vmem:[#allocation8 + $0x3b8] sm:$0xff]
    %v864 = vld [vmem:[#allocation8 + $0x3c0] sm:$0xff]
    %v865 = vld [vmem:[#allocation8 + $0x3c8] sm:$0xff]
    %v866 = vld [vmem:[#allocation8 + $0x3d0] sm:$0xff]
    %v867 = vld [vmem:[#allocation8 + $0x3d8] sm:$0xff]
    %v868 = vld [vmem:[#allocation8 + $0x3e0] sm:$0xff]
    %v869 = vld [vmem:[#allocation8 + $0x3e8] sm:$0xff]
    %v870 = vld [vmem:[#allocation8 + $0x3f0] sm:$0xff]
    %v871 = vld [vmem:[#allocation8 + $0x3f8] sm:$0xff]
    %v872 = vld [vmem:[%s4] sm:$0x3]
    %v874 = vlaneseq
    %v875 = vshrl.u32 %v874, 7
    %v876 = vsub.s32 0, %v875
    %v877 = vrot.slane %v872, %v876
    %v878 = vlaneseq
    %v879 = vshrl.u32 %v878, 7
    %v880 = vsub.s32 1, %v879
    %v881 = vrot.slane %v872, %v880
    %v1012 = vunpack.c.l.b16 %v744
    %v1013 = vunpack.c.h.b16 %v744
    %v1014 = vunpack.c.l.b16 %v745
    %v1015 = vunpack.c.h.b16 %v745
    %v1016 = vunpack.c.l.b16 %v746
    %v1017 = vunpack.c.h.b16 %v746
    %v1018 = vunpack.c.l.b16 %v747
    %v1019 = vunpack.c.h.b16 %v747
    %v1020 = vunpack.c.l.b16 %v748
    %v1021 = vunpack.c.h.b16 %v748
    %v1022 = vunpack.c.l.b16 %v749
    %v1023 = vunpack.c.h.b16 %v749
    %v1024 = vunpack.c.l.b16 %v750
    %v1025 = vunpack.c.h.b16 %v750
    %v1026 = vunpack.c.l.b16 %v751
    %v1027 = vunpack.c.h.b16 %v751
    %v1028 = vunpack.c.l.b16 %v752
    %v1029 = vunpack.c.h.b16 %v752
    %v1030 = vunpack.c.l.b16 %v753
    %v1031 = vunpack.c.h.b16 %v753
    %v1032 = vunpack.c.l.b16 %v754
    %v1033 = vunpack.c.h.b16 %v754
    %v1034 = vunpack.c.l.b16 %v755
    %v1035 = vunpack.c.h.b16 %v755
    %v1036 = vunpack.c.l.b16 %v756
    %v1037 = vunpack.c.h.b16 %v756
    %v1038 = vunpack.c.l.b16 %v757
    %v1039 = vunpack.c.h.b16 %v757
    %v1040 = vunpack.c.l.b16 %v758
    %v1041 = vunpack.c.h.b16 %v758
    %v1042 = vunpack.c.l.b16 %v759
    %v1043 = vunpack.c.h.b16 %v759
    %v1044 = vunpack.c.l.b16 %v760
    %v1045 = vunpack.c.h.b16 %v760
    %v1046 = vunpack.c.l.b16 %v761
    %v1047 = vunpack.c.h.b16 %v761
    %v1048 = vunpack.c.l.b16 %v762
    %v1049 = vunpack.c.h.b16 %v762
    %v1050 = vunpack.c.l.b16 %v763
    %v1051 = vunpack.c.h.b16 %v763
    %v1052 = vunpack.c.l.b16 %v764
    %v1053 = vunpack.c.h.b16 %v764
    %v1054 = vunpack.c.l.b16 %v765
    %v1055 = vunpack.c.h.b16 %v765
    %v1056 = vunpack.c.l.b16 %v766
    %v1057 = vunpack.c.h.b16 %v766
    %v1058 = vunpack.c.l.b16 %v767
    %v1059 = vunpack.c.h.b16 %v767
    %v1060 = vunpack.c.l.b16 %v768
    %v1061 = vunpack.c.h.b16 %v768
    %v1062 = vunpack.c.l.b16 %v769
    %v1063 = vunpack.c.h.b16 %v769
    %v1064 = vunpack.c.l.b16 %v770
    %v1065 = vunpack.c.h.b16 %v770
    %v1066 = vunpack.c.l.b16 %v771
    %v1067 = vunpack.c.h.b16 %v771
    %v1068 = vunpack.c.l.b16 %v772
    %v1069 = vunpack.c.h.b16 %v772
    %v1070 = vunpack.c.l.b16 %v773
    %v1071 = vunpack.c.h.b16 %v773
    %v1072 = vunpack.c.l.b16 %v774
    %v1073 = vunpack.c.h.b16 %v774
    %v1074 = vunpack.c.l.b16 %v775
    %v1075 = vunpack.c.h.b16 %v775
    %v1076 = vunpack.c.l.b16 %v776
    %v1077 = vunpack.c.h.b16 %v776
    %v1078 = vunpack.c.l.b16 %v777
    %v1079 = vunpack.c.h.b16 %v777
    %v1080 = vunpack.c.l.b16 %v778
    %v1081 = vunpack.c.h.b16 %v778
    %v1082 = vunpack.c.l.b16 %v779
    %v1083 = vunpack.c.h.b16 %v779
    %v1084 = vunpack.c.l.b16 %v780
    %v1085 = vunpack.c.h.b16 %v780
    %v1086 = vunpack.c.l.b16 %v781
    %v1087 = vunpack.c.h.b16 %v781
    %v1088 = vunpack.c.l.b16 %v782
    %v1089 = vunpack.c.h.b16 %v782
    %v1090 = vunpack.c.l.b16 %v783
    %v1091 = vunpack.c.h.b16 %v783
    %v1092 = vunpack.c.l.b16 %v784
    %v1093 = vunpack.c.h.b16 %v784
    %v1094 = vunpack.c.l.b16 %v785
    %v1095 = vunpack.c.h.b16 %v785
    %v1096 = vunpack.c.l.b16 %v786
    %v1097 = vunpack.c.h.b16 %v786
    %v1098 = vunpack.c.l.b16 %v787
    %v1099 = vunpack.c.h.b16 %v787
    %v1100 = vunpack.c.l.b16 %v788
    %v1101 = vunpack.c.h.b16 %v788
    %v1102 = vunpack.c.l.b16 %v789
    %v1103 = vunpack.c.h.b16 %v789
    %v1104 = vunpack.c.l.b16 %v790
    %v1105 = vunpack.c.h.b16 %v790
    %v1106 = vunpack.c.l.b16 %v791
    %v1107 = vunpack.c.h.b16 %v791
    %v1108 = vunpack.c.l.b16 %v792
    %v1109 = vunpack.c.h.b16 %v792
    %v1110 = vunpack.c.l.b16 %v793
    %v1111 = vunpack.c.h.b16 %v793
    %v1112 = vunpack.c.l.b16 %v794
    %v1113 = vunpack.c.h.b16 %v794
    %v1114 = vunpack.c.l.b16 %v795
    %v1115 = vunpack.c.h.b16 %v795
    %v1116 = vunpack.c.l.b16 %v796
    %v1117 = vunpack.c.h.b16 %v796
    %v1118 = vunpack.c.l.b16 %v797
    %v1119 = vunpack.c.h.b16 %v797
    %v1120 = vunpack.c.l.b16 %v798
    %v1121 = vunpack.c.h.b16 %v798
    %v1122 = vunpack.c.l.b16 %v799
    %v1123 = vunpack.c.h.b16 %v799
    %v1124 = vunpack.c.l.b16 %v800
    %v1125 = vunpack.c.h.b16 %v800
    %v1126 = vunpack.c.l.b16 %v801
    %v1127 = vunpack.c.h.b16 %v801
    %v1128 = vunpack.c.l.b16 %v802
    %v1129 = vunpack.c.h.b16 %v802
    %v1130 = vunpack.c.l.b16 %v803
    %v1131 = vunpack.c.h.b16 %v803
    %v1132 = vunpack.c.l.b16 %v804
    %v1133 = vunpack.c.h.b16 %v804
    %v1134 = vunpack.c.l.b16 %v805
    %v1135 = vunpack.c.h.b16 %v805
    %v1136 = vunpack.c.l.b16 %v806
    %v1137 = vunpack.c.h.b16 %v806
    %v1138 = vunpack.c.l.b16 %v807
    %v1139 = vunpack.c.h.b16 %v807
    %v1140 = vunpack.c.l.b16 %v808
    %v1141 = vunpack.c.h.b16 %v808
    %v1142 = vunpack.c.l.b16 %v809
    %v1143 = vunpack.c.h.b16 %v809
    %v1144 = vunpack.c.l.b16 %v810
    %v1145 = vunpack.c.h.b16 %v810
    %v1146 = vunpack.c.l.b16 %v811
    %v1147 = vunpack.c.h.b16 %v811
    %v1148 = vunpack.c.l.b16 %v812
    %v1149 = vunpack.c.h.b16 %v812
    %v1150 = vunpack.c.l.b16 %v813
    %v1151 = vunpack.c.h.b16 %v813
    %v1152 = vunpack.c.l.b16 %v814
    %v1153 = vunpack.c.h.b16 %v814
    %v1154 = vunpack.c.l.b16 %v815
    %v1155 = vunpack.c.h.b16 %v815
    %v1156 = vunpack.c.l.b16 %v816
    %v1157 = vunpack.c.h.b16 %v816
    %v1158 = vunpack.c.l.b16 %v817
    %v1159 = vunpack.c.h.b16 %v817
    %v1160 = vunpack.c.l.b16 %v818
    %v1161 = vunpack.c.h.b16 %v818
    %v1162 = vunpack.c.l.b16 %v819
    %v1163 = vunpack.c.h.b16 %v819
    %v1164 = vunpack.c.l.b16 %v820
    %v1165 = vunpack.c.h.b16 %v820
    %v1166 = vunpack.c.l.b16 %v821
    %v1167 = vunpack.c.h.b16 %v821
    %v1168 = vunpack.c.l.b16 %v822
    %v1169 = vunpack.c.h.b16 %v822
    %v1170 = vunpack.c.l.b16 %v823
    %v1171 = vunpack.c.h.b16 %v823
    %v1172 = vunpack.c.l.b16 %v824
    %v1173 = vunpack.c.h.b16 %v824
    %v1174 = vunpack.c.l.b16 %v825
    %v1175 = vunpack.c.h.b16 %v825
    %v1176 = vunpack.c.l.b16 %v826
    %v1177 = vunpack.c.h.b16 %v826
    %v1178 = vunpack.c.l.b16 %v827
    %v1179 = vunpack.c.h.b16 %v827
    %v1180 = vunpack.c.l.b16 %v828
    %v1181 = vunpack.c.h.b16 %v828
    %v1182 = vunpack.c.l.b16 %v829
    %v1183 = vunpack.c.h.b16 %v829
    %v1184 = vunpack.c.l.b16 %v830
    %v1185 = vunpack.c.h.b16 %v830
    %v1186 = vunpack.c.l.b16 %v831
    %v1187 = vunpack.c.h.b16 %v831
    %v1188 = vunpack.c.l.b16 %v832
    %v1189 = vunpack.c.h.b16 %v832
    %v1190 = vunpack.c.l.b16 %v833
    %v1191 = vunpack.c.h.b16 %v833
    %v1192 = vunpack.c.l.b16 %v834
    %v1193 = vunpack.c.h.b16 %v834
    %v1194 = vunpack.c.l.b16 %v835
    %v1195 = vunpack.c.h.b16 %v835
    %v1196 = vunpack.c.l.b16 %v836
    %v1197 = vunpack.c.h.b16 %v836
    %v1198 = vunpack.c.l.b16 %v837
    %v1199 = vunpack.c.h.b16 %v837
    %v1200 = vunpack.c.l.b16 %v838
    %v1201 = vunpack.c.h.b16 %v838
    %v1202 = vunpack.c.l.b16 %v839
    %v1203 = vunpack.c.h.b16 %v839
    %v1204 = vunpack.c.l.b16 %v840
    %v1205 = vunpack.c.h.b16 %v840
    %v1206 = vunpack.c.l.b16 %v841
    %v1207 = vunpack.c.h.b16 %v841
    %v1208 = vunpack.c.l.b16 %v842
    %v1209 = vunpack.c.h.b16 %v842
    %v1210 = vunpack.c.l.b16 %v843
    %v1211 = vunpack.c.h.b16 %v843
    %v1212 = vunpack.c.l.b16 %v844
    %v1213 = vunpack.c.h.b16 %v844
    %v1214 = vunpack.c.l.b16 %v845
    %v1215 = vunpack.c.h.b16 %v845
    %v1216 = vunpack.c.l.b16 %v846
    %v1217 = vunpack.c.h.b16 %v846
    %v1218 = vunpack.c.l.b16 %v847
    %v1219 = vunpack.c.h.b16 %v847
    %v1220 = vunpack.c.l.b16 %v848
    %v1221 = vunpack.c.h.b16 %v848
    %v1222 = vunpack.c.l.b16 %v849
    %v1223 = vunpack.c.h.b16 %v849
    %v1224 = vunpack.c.l.b16 %v850
    %v1225 = vunpack.c.h.b16 %v850
    %v1226 = vunpack.c.l.b16 %v851
    %v1227 = vunpack.c.h.b16 %v851
    %v1228 = vunpack.c.l.b16 %v852
    %v1229 = vunpack.c.h.b16 %v852
    %v1230 = vunpack.c.l.b16 %v853
    %v1231 = vunpack.c.h.b16 %v853
    %v1232 = vunpack.c.l.b16 %v854
    %v1233 = vunpack.c.h.b16 %v854
    %v1234 = vunpack.c.l.b16 %v855
    %v1235 = vunpack.c.h.b16 %v855
    %v1236 = vunpack.c.l.b16 %v856
    %v1237 = vunpack.c.h.b16 %v856
    %v1238 = vunpack.c.l.b16 %v857
    %v1239 = vunpack.c.h.b16 %v857
    %v1240 = vunpack.c.l.b16 %v858
    %v1241 = vunpack.c.h.b16 %v858
    %v1242 = vunpack.c.l.b16 %v859
    %v1243 = vunpack.c.h.b16 %v859
    %v1244 = vunpack.c.l.b16 %v860
    %v1245 = vunpack.c.h.b16 %v860
    %v1246 = vunpack.c.l.b16 %v861
    %v1247 = vunpack.c.h.b16 %v861
    %v1248 = vunpack.c.l.b16 %v862
    %v1249 = vunpack.c.h.b16 %v862
    %v1250 = vunpack.c.l.b16 %v863
    %v1251 = vunpack.c.h.b16 %v863
    %v1252 = vunpack.c.l.b16 %v864
    %v1253 = vunpack.c.h.b16 %v864
    %v1254 = vunpack.c.l.b16 %v865
    %v1255 = vunpack.c.h.b16 %v865
    %v1256 = vunpack.c.l.b16 %v866
    %v1257 = vunpack.c.h.b16 %v866
    %v1258 = vunpack.c.l.b16 %v867
    %v1259 = vunpack.c.h.b16 %v867
    %v1260 = vunpack.c.l.b16 %v868
    %v1261 = vunpack.c.h.b16 %v868
    %v1262 = vunpack.c.l.b16 %v869
    %v1263 = vunpack.c.h.b16 %v869
    %v1264 = vunpack.c.l.b16 %v870
    %v1265 = vunpack.c.h.b16 %v870
    %v1266 = vunpack.c.l.b16 %v871
    %v1267 = vunpack.c.h.b16 %v871
    %v1268 = vpack.c.b16 %v1014, %v1012
    %v1269 = vpack.c.b16 %v1015, %v1013
    %v1270 = vpack.c.b16 %v1018, %v1016
    %v1271 = vpack.c.b16 %v1019, %v1017
    %v1272 = vpack.c.b16 %v1022, %v1020
    %v1273 = vpack.c.b16 %v1023, %v1021
    %v1274 = vpack.c.b16 %v1026, %v1024
    %v1275 = vpack.c.b16 %v1027, %v1025
    %v1276 = vpack.c.b16 %v1030, %v1028
    %v1277 = vpack.c.b16 %v1031, %v1029
    %v1278 = vpack.c.b16 %v1034, %v1032
    %v1279 = vpack.c.b16 %v1035, %v1033
    %v1280 = vpack.c.b16 %v1038, %v1036
    %v1281 = vpack.c.b16 %v1039, %v1037
    %v1282 = vpack.c.b16 %v1042, %v1040
    %v1283 = vpack.c.b16 %v1043, %v1041
    %v1284 = vpack.c.b16 %v1046, %v1044
    %v1285 = vpack.c.b16 %v1047, %v1045
    %v1286 = vpack.c.b16 %v1050, %v1048
    %v1287 = vpack.c.b16 %v1051, %v1049
    %v1288 = vpack.c.b16 %v1054, %v1052
    %v1289 = vpack.c.b16 %v1055, %v1053
    %v1290 = vpack.c.b16 %v1058, %v1056
    %v1291 = vpack.c.b16 %v1059, %v1057
    %v1292 = vpack.c.b16 %v1062, %v1060
    %v1293 = vpack.c.b16 %v1063, %v1061
    %v1294 = vpack.c.b16 %v1066, %v1064
    %v1295 = vpack.c.b16 %v1067, %v1065
    %v1296 = vpack.c.b16 %v1070, %v1068
    %v1297 = vpack.c.b16 %v1071, %v1069
    %v1298 = vpack.c.b16 %v1074, %v1072
    %v1299 = vpack.c.b16 %v1075, %v1073
    %v1300 = vpack.c.b16 %v1078, %v1076
    %v1301 = vpack.c.b16 %v1079, %v1077
    %v1302 = vpack.c.b16 %v1082, %v1080
    %v1303 = vpack.c.b16 %v1083, %v1081
    %v1304 = vpack.c.b16 %v1086, %v1084
    %v1305 = vpack.c.b16 %v1087, %v1085
    %v1306 = vpack.c.b16 %v1090, %v1088
    %v1307 = vpack.c.b16 %v1091, %v1089
    %v1308 = vpack.c.b16 %v1094, %v1092
    %v1309 = vpack.c.b16 %v1095, %v1093
    %v1310 = vpack.c.b16 %v1098, %v1096
    %v1311 = vpack.c.b16 %v1099, %v1097
    %v1312 = vpack.c.b16 %v1102, %v1100
    %v1313 = vpack.c.b16 %v1103, %v1101
    %v1314 = vpack.c.b16 %v1106, %v1104
    %v1315 = vpack.c.b16 %v1107, %v1105
    %v1316 = vpack.c.b16 %v1110, %v1108
    %v1317 = vpack.c.b16 %v1111, %v1109
    %v1318 = vpack.c.b16 %v1114, %v1112
    %v1319 = vpack.c.b16 %v1115, %v1113
    %v1320 = vpack.c.b16 %v1118, %v1116
    %v1321 = vpack.c.b16 %v1119, %v1117
    %v1322 = vpack.c.b16 %v1122, %v1120
    %v1323 = vpack.c.b16 %v1123, %v1121
    %v1324 = vpack.c.b16 %v1126, %v1124
    %v1325 = vpack.c.b16 %v1127, %v1125
    %v1326 = vpack.c.b16 %v1130, %v1128
    %v1327 = vpack.c.b16 %v1131, %v1129
    %v1328 = vpack.c.b16 %v1134, %v1132
    %v1329 = vpack.c.b16 %v1135, %v1133
    %v1330 = vpack.c.b16 %v1138, %v1136
    %v1331 = vpack.c.b16 %v1139, %v1137
    %v1332 = vpack.c.b16 %v1142, %v1140
    %v1333 = vpack.c.b16 %v1143, %v1141
    %v1334 = vpack.c.b16 %v1146, %v1144
    %v1335 = vpack.c.b16 %v1147, %v1145
    %v1336 = vpack.c.b16 %v1150, %v1148
    %v1337 = vpack.c.b16 %v1151, %v1149
    %v1338 = vpack.c.b16 %v1154, %v1152
    %v1339 = vpack.c.b16 %v1155, %v1153
    %v1340 = vpack.c.b16 %v1158, %v1156
    %v1341 = vpack.c.b16 %v1159, %v1157
    %v1342 = vpack.c.b16 %v1162, %v1160
    %v1343 = vpack.c.b16 %v1163, %v1161
    %v1344 = vpack.c.b16 %v1166, %v1164
    %v1345 = vpack.c.b16 %v1167, %v1165
    %v1346 = vpack.c.b16 %v1170, %v1168
    %v1347 = vpack.c.b16 %v1171, %v1169
    %v1348 = vpack.c.b16 %v1174, %v1172
    %v1349 = vpack.c.b16 %v1175, %v1173
    %v1350 = vpack.c.b16 %v1178, %v1176
    %v1351 = vpack.c.b16 %v1179, %v1177
    %v1352 = vpack.c.b16 %v1182, %v1180
    %v1353 = vpack.c.b16 %v1183, %v1181
    %v1354 = vpack.c.b16 %v1186, %v1184
    %v1355 = vpack.c.b16 %v1187, %v1185
    %v1356 = vpack.c.b16 %v1190, %v1188
    %v1357 = vpack.c.b16 %v1191, %v1189
    %v1358 = vpack.c.b16 %v1194, %v1192
    %v1359 = vpack.c.b16 %v1195, %v1193
    %v1360 = vpack.c.b16 %v1198, %v1196
    %v1361 = vpack.c.b16 %v1199, %v1197
    %v1362 = vpack.c.b16 %v1202, %v1200
    %v1363 = vpack.c.b16 %v1203, %v1201
    %v1364 = vpack.c.b16 %v1206, %v1204
    %v1365 = vpack.c.b16 %v1207, %v1205
    %v1366 = vpack.c.b16 %v1210, %v1208
    %v1367 = vpack.c.b16 %v1211, %v1209
    %v1368 = vpack.c.b16 %v1214, %v1212
    %v1369 = vpack.c.b16 %v1215, %v1213
    %v1370 = vpack.c.b16 %v1218, %v1216
    %v1371 = vpack.c.b16 %v1219, %v1217
    %v1372 = vpack.c.b16 %v1222, %v1220
    %v1373 = vpack.c.b16 %v1223, %v1221
    %v1374 = vpack.c.b16 %v1226, %v1224
    %v1375 = vpack.c.b16 %v1227, %v1225
    %v1376 = vpack.c.b16 %v1230, %v1228
    %v1377 = vpack.c.b16 %v1231, %v1229
    %v1378 = vpack.c.b16 %v1234, %v1232
    %v1379 = vpack.c.b16 %v1235, %v1233
    %v1380 = vpack.c.b16 %v1238, %v1236
    %v1381 = vpack.c.b16 %v1239, %v1237
    %v1382 = vpack.c.b16 %v1242, %v1240
    %v1383 = vpack.c.b16 %v1243, %v1241
    %v1384 = vpack.c.b16 %v1246, %v1244
    %v1385 = vpack.c.b16 %v1247, %v1245
    %v1386 = vpack.c.b16 %v1250, %v1248
    %v1387 = vpack.c.b16 %v1251, %v1249
    %v1388 = vpack.c.b16 %v1254, %v1252
    %v1389 = vpack.c.b16 %v1255, %v1253
    %v1390 = vpack.c.b16 %v1258, %v1256
    %v1391 = vpack.c.b16 %v1259, %v1257
    %v1392 = vpack.c.b16 %v1262, %v1260
    %v1393 = vpack.c.b16 %v1263, %v1261
    %v1394 = vpack.c.b16 %v1266, %v1264
    %v1395 = vpack.c.b16 %v1267, %v1265
    %1524 = vmatprep.subr.bf16.mxu0 %v1269
    %1525 = vmatpush1.bf16.msra.mxu0 %v1268
    %1526 = vmatprep.subr.bf16.mxu0 %v1271
    %1527 = vmatpush1.bf16.msra.mxu0 %v1270
    %1528 = vmatprep.subr.bf16.mxu0 %v1273
    %1529 = vmatpush1.bf16.msra.mxu0 %v1272
    %1530 = vmatprep.subr.bf16.mxu0 %v1275
    %1531 = vmatpush1.bf16.msra.mxu0 %v1274
    %1532 = vmatprep.subr.bf16.mxu0 %v1277
    %1533 = vmatpush1.bf16.msra.mxu0 %v1276
    %1534 = vmatprep.subr.bf16.mxu0 %v1279
    %1535 = vmatpush1.bf16.msra.mxu0 %v1278
    %1536 = vmatprep.subr.bf16.mxu0 %v1281
    %1537 = vmatpush1.bf16.msra.mxu0 %v1280
    %1538 = vmatprep.subr.bf16.mxu0 %v1283
    %1539 = vmatpush1.bf16.msra.mxu0 %v1282
    %1540 = vmatprep.subr.bf16.mxu0 %v1285
    %1541 = vmatpush1.bf16.msra.mxu0 %v1284
    %1542 = vmatprep.subr.bf16.mxu0 %v1287
    %1543 = vmatpush1.bf16.msra.mxu0 %v1286
    %1544 = vmatprep.subr.bf16.mxu0 %v1289
    %1545 = vmatpush1.bf16.msra.mxu0 %v1288
    %1546 = vmatprep.subr.bf16.mxu0 %v1291
    %1547 = vmatpush1.bf16.msra.mxu0 %v1290
    %1548 = vmatprep.subr.bf16.mxu0 %v1293
    %1549 = vmatpush1.bf16.msra.mxu0 %v1292
    %1550 = vmatprep.subr.bf16.mxu0 %v1295
    %1551 = vmatpush1.bf16.msra.mxu0 %v1294
    %1552 = vmatprep.subr.bf16.mxu0 %v1297
    %1553 = vmatpush1.bf16.msra.mxu0 %v1296
    %1554 = vmatprep.subr.bf16.mxu0 %v1299
    %1555 = vmatpush1.bf16.msra.mxu0 %v1298
    %1556 = vmatprep.mubr.bf16.mxu0 %v737
    %1557 = vmatmul.mubr.bf16.gmra.mrb[0].mxu0 %v736
    %v1558 = vpop.f32.mrb[0].mxu0
    %v1559 = vadd.f32 %v877, %v1558
    %v1560 = vpop.f32.mrb[0].mxu0
    %v1561 = vadd.f32 %v881, %v1560
    %v1562 = vpop.f32.mrb[0].mxu0
    %v1563 = vadd.f32 %v877, %v1562
    %v1564 = vpop.f32.mrb[0].mxu0
    %v1565 = vadd.f32 %v881, %v1564
    %1566 = vdwg.mxu0
    %1567 = vmatprep.subr.bf16.mxu0 %v1301
    %1568 = vmatpush1.bf16.msra.mxu0 %v1300
    %1569 = vmatprep.subr.bf16.mxu0 %v1303
    %1570 = vmatpush1.bf16.msra.mxu0 %v1302
    %1571 = vmatprep.subr.bf16.mxu0 %v1305
    %1572 = vmatpush1.bf16.msra.mxu0 %v1304
    %1573 = vmatprep.subr.bf16.mxu0 %v1307
    %1574 = vmatpush1.bf16.msra.mxu0 %v1306
    %1575 = vmatprep.subr.bf16.mxu0 %v1309
    %1576 = vmatpush1.bf16.msra.mxu0 %v1308
    %1577 = vmatprep.subr.bf16.mxu0 %v1311
    %1578 = vmatpush1.bf16.msra.mxu0 %v1310
    %1579 = vmatprep.subr.bf16.mxu0 %v1313
    %1580 = vmatpush1.bf16.msra.mxu0 %v1312
    %1581 = vmatprep.subr.bf16.mxu0 %v1315
    %1582 = vmatpush1.bf16.msra.mxu0 %v1314
    %1583 = vmatprep.subr.bf16.mxu0 %v1317
    %1584 = vmatpush1.bf16.msra.mxu0 %v1316
    %1585 = vmatprep.subr.bf16.mxu0 %v1319
    %1586 = vmatpush1.bf16.msra.mxu0 %v1318
    %1587 = vmatprep.subr.bf16.mxu0 %v1321
    %1588 = vmatpush1.bf16.msra.mxu0 %v1320
    %1589 = vmatprep.subr.bf16.mxu0 %v1323
    %1590 = vmatpush1.bf16.msra.mxu0 %v1322
    %1591 = vmatprep.subr.bf16.mxu0 %v1325
    %1592 = vmatpush1.bf16.msra.mxu0 %v1324
    %1593 = vmatprep.subr.bf16.mxu0 %v1327
    %1594 = vmatpush1.bf16.msra.mxu0 %v1326
    %1595 = vmatprep.subr.bf16.mxu0 %v1329
    %1596 = vmatpush1.bf16.msra.mxu0 %v1328
    %1597 = vmatprep.subr.bf16.mxu0 %v1331
    %1598 = vmatpush1.bf16.msra.mxu0 %v1330
    %1599 = vmatprep.mubr.bf16.mxu0 %v739
    %1600 = vmatmul.mubr.bf16.gmra.mrb[0].mxu0 %v738
    %v1601 = vpop.f32.mrb[0].mxu0
    %v1602 = vadd.f32 %v1559, %v1601
    %v1603 = vpop.f32.mrb[0].mxu0
    %v1604 = vadd.f32 %v1561, %v1603
    %v1605 = vpop.f32.mrb[0].mxu0
    %v1606 = vadd.f32 %v1563, %v1605
    %v1607 = vpop.f32.mrb[0].mxu0
    %v1608 = vadd.f32 %v1565, %v1607
    %1609 = vdwg.mxu0
    %1610 = vmatprep.subr.bf16.mxu0 %v1333
    %1611 = vmatpush1.bf16.msra.mxu0 %v1332
    %1612 = vmatprep.subr.bf16.mxu0 %v1335
    %1613 = vmatpush1.bf16.msra.mxu0 %v1334
    %1614 = vmatprep.subr.bf16.mxu0 %v1337
    %1615 = vmatpush1.bf16.msra.mxu0 %v1336
    %1616 = vmatprep.subr.bf16.mxu0 %v1339
    %1617 = vmatpush1.bf16.msra.mxu0 %v1338
    %1618 = vmatprep.subr.bf16.mxu0 %v1341
    %1619 = vmatpush1.bf16.msra.mxu0 %v1340
    %1620 = vmatprep.subr.bf16.mxu0 %v1343
    %1621 = vmatpush1.bf16.msra.mxu0 %v1342
    %1622 = vmatprep.subr.bf16.mxu0 %v1345
    %1623 = vmatpush1.bf16.msra.mxu0 %v1344
    %1624 = vmatprep.subr.bf16.mxu0 %v1347
    %1625 = vmatpush1.bf16.msra.mxu0 %v1346
    %1626 = vmatprep.subr.bf16.mxu0 %v1349
    %1627 = vmatpush1.bf16.msra.mxu0 %v1348
    %1628 = vmatprep.subr.bf16.mxu0 %v1351
    %1629 = vmatpush1.bf16.msra.mxu0 %v1350
    %1630 = vmatprep.subr.bf16.mxu0 %v1353
    %1631 = vmatpush1.bf16.msra.mxu0 %v1352
    %1632 = vmatprep.subr.bf16.mxu0 %v1355
    %1633 = vmatpush1.bf16.msra.mxu0 %v1354
    %1634 = vmatprep.subr.bf16.mxu0 %v1357
    %1635 = vmatpush1.bf16.msra.mxu0 %v1356
    %1636 = vmatprep.subr.bf16.mxu0 %v1359
    %1637 = vmatpush1.bf16.msra.mxu0 %v1358
    %1638 = vmatprep.subr.bf16.mxu0 %v1361
    %1639 = vmatpush1.bf16.msra.mxu0 %v1360
    %1640 = vmatprep.subr.bf16.mxu0 %v1363
    %1641 = vmatpush1.bf16.msra.mxu0 %v1362
    %1642 = vmatprep.mubr.bf16.mxu0 %v741
    %1643 = vmatmul.mubr.bf16.gmra.mrb[0].mxu0 %v740
    %v1644 = vpop.f32.mrb[0].mxu0
    %v1645 = vadd.f32 %v1602, %v1644
    %v1646 = vpop.f32.mrb[0].mxu0
    %v1647 = vadd.f32 %v1604, %v1646
    %v1648 = vpop.f32.mrb[0].mxu0
    %v1649 = vadd.f32 %v1606, %v1648
    %v1650 = vpop.f32.mrb[0].mxu0
    %v1651 = vadd.f32 %v1608, %v1650
    %1652 = vdwg.mxu0
    %1653 = vmatprep.subr.bf16.mxu0 %v1365
    %1654 = vmatpush1.bf16.msra.mxu0 %v1364
    %1655 = vmatprep.subr.bf16.mxu0 %v1367
    %1656 = vmatpush1.bf16.msra.mxu0 %v1366
    %1657 = vmatprep.subr.bf16.mxu0 %v1369
    %1658 = vmatpush1.bf16.msra.mxu0 %v1368
    %1659 = vmatprep.subr.bf16.mxu0 %v1371
    %1660 = vmatpush1.bf16.msra.mxu0 %v1370
    %1661 = vmatprep.subr.bf16.mxu0 %v1373
    %1662 = vmatpush1.bf16.msra.mxu0 %v1372
    %1663 = vmatprep.subr.bf16.mxu0 %v1375
    %1664 = vmatpush1.bf16.msra.mxu0 %v1374
    %1665 = vmatprep.subr.bf16.mxu0 %v1377
    %1666 = vmatpush1.bf16.msra.mxu0 %v1376
    %1667 = vmatprep.subr.bf16.mxu0 %v1379
    %1668 = vmatpush1.bf16.msra.mxu0 %v1378
    %1669 = vmatprep.subr.bf16.mxu0 %v1381
    %1670 = vmatpush1.bf16.msra.mxu0 %v1380
    %1671 = vmatprep.subr.bf16.mxu0 %v1383
    %1672 = vmatpush1.bf16.msra.mxu0 %v1382
    %1673 = vmatprep.subr.bf16.mxu0 %v1385
    %1674 = vmatpush1.bf16.msra.mxu0 %v1384
    %1675 = vmatprep.subr.bf16.mxu0 %v1387
    %1676 = vmatpush1.bf16.msra.mxu0 %v1386
    %1677 = vmatprep.subr.bf16.mxu0 %v1389
    %1678 = vmatpush1.bf16.msra.mxu0 %v1388
    %1679 = vmatprep.subr.bf16.mxu0 %v1391
    %1680 = vmatpush1.bf16.msra.mxu0 %v1390
    %1681 = vmatprep.subr.bf16.mxu0 %v1393
    %1682 = vmatpush1.bf16.msra.mxu0 %v1392
    %1683 = vmatprep.subr.bf16.mxu0 %v1395
    %1684 = vmatpush1.bf16.msra.mxu0 %v1394
    %1685 = vmatprep.mubr.bf16.mxu0 %v743
    %1686 = vmatmul.mubr.bf16.gmra.mrb[0].mxu0 %v742
    %v1687 = vpop.f32.mrb[0].mxu0
    %v1688 = vadd.f32 %v1645, %v1687
    %v1689 = vpop.f32.mrb[0].mxu0
    %v1690 = vadd.f32 %v1647, %v1689
    %v1691 = vpop.f32.mrb[0].mxu0
    %v1692 = vadd.f32 %v1649, %v1691
    %v1693 = vpop.f32.mrb[0].mxu0
    %v1694 = vadd.f32 %v1651, %v1693
    %1695 = vdwg.mxu0
    %v1696 = vmax.f32 %v1688, 0.0
    %v1697 = vmax.f32 %v1690, 0.0
    %v1698 = vmax.f32 %v1692, 0.0
    %v1699 = vmax.f32 %v1694, 0.0
    %v1700 = vpack.c.bf16 %v1698, %v1696
    %v1701 = vpack.c.bf16 %v1699, %v1697
    %v1702 = vld [vmem:[#allocation10] sm:$0xff]
    %v1703 = vld [vmem:[#allocation10 + $0x8] sm:$0xff]
    %v1704 = vld [vmem:[#allocation10 + $0x10] sm:$0xff]
    %v1705 = vld [vmem:[#allocation10 + $0x18] sm:$0xff]
    %v1706 = vld [vmem:[#allocation10 + $0x20] sm:$0xff]
    %v1707 = vld [vmem:[#allocation10 + $0x28] sm:$0xff]
    %v1708 = vld [vmem:[#allocation10 + $0x30] sm:$0xff]
    %v1709 = vld [vmem:[#allocation10 + $0x38] sm:$0xff]
    %v1710 = vld [vmem:[#allocation10 + $0x40] sm:$0xff]
    %v1711 = vld [vmem:[#allocation10 + $0x48] sm:$0xff]
    %v1712 = vld [vmem:[#allocation10 + $0x50] sm:$0xff]
    %v1713 = vld [vmem:[#allocation10 + $0x58] sm:$0xff]
    %v1714 = vld [vmem:[#allocation10 + $0x60] sm:$0xff]
    %v1715 = vld [vmem:[#allocation10 + $0x68] sm:$0xff]
    %v1716 = vld [vmem:[#allocation10 + $0x70] sm:$0xff]
    %v1717 = vld [vmem:[#allocation10 + $0x78] sm:$0xff]
    %v1718 = vld [vmem:[#allocation10 + $0x80] sm:$0xff]
    %v1719 = vld [vmem:[#allocation10 + $0x88] sm:$0xff]
    %v1720 = vld [vmem:[#allocation10 + $0x90] sm:$0xff]
    %v1721 = vld [vmem:[#allocation10 + $0x98] sm:$0xff]
    %v1722 = vld [vmem:[#allocation10 + $0xa0] sm:$0xff]
    %v1723 = vld [vmem:[#allocation10 + $0xa8] sm:$0xff]
    %v1724 = vld [vmem:[#allocation10 + $0xb0] sm:$0xff]
    %v1725 = vld [vmem:[#allocation10 + $0xb8] sm:$0xff]
    %v1726 = vld [vmem:[#allocation10 + $0xc0] sm:$0xff]
    %v1727 = vld [vmem:[#allocation10 + $0xc8] sm:$0xff]
    %v1728 = vld [vmem:[#allocation10 + $0xd0] sm:$0xff]
    %v1729 = vld [vmem:[#allocation10 + $0xd8] sm:$0xff]
    %v1730 = vld [vmem:[#allocation10 + $0xe0] sm:$0xff]
    %v1731 = vld [vmem:[#allocation10 + $0xe8] sm:$0xff]
    %v1732 = vld [vmem:[#allocation10 + $0xf0] sm:$0xff]
    %v1733 = vld [vmem:[#allocation10 + $0xf8] sm:$0xff]
    %v1734 = vld [vmem:[#allocation10 + $0x100] sm:$0xff]
    %v1735 = vld [vmem:[#allocation10 + $0x108] sm:$0xff]
    %v1736 = vld [vmem:[#allocation10 + $0x110] sm:$0xff]
    %v1737 = vld [vmem:[#allocation10 + $0x118] sm:$0xff]
    %v1738 = vld [vmem:[#allocation10 + $0x120] sm:$0xff]
    %v1739 = vld [vmem:[#allocation10 + $0x128] sm:$0xff]
    %v1740 = vld [vmem:[#allocation10 + $0x130] sm:$0xff]
    %v1741 = vld [vmem:[#allocation10 + $0x138] sm:$0xff]
    %v1742 = vld [vmem:[#allocation10 + $0x140] sm:$0xff]
    %v1743 = vld [vmem:[#allocation10 + $0x148] sm:$0xff]
    %v1744 = vld [vmem:[#allocation10 + $0x150] sm:$0xff]
    %v1745 = vld [vmem:[#allocation10 + $0x158] sm:$0xff]
    %v1746 = vld [vmem:[#allocation10 + $0x160] sm:$0xff]
    %v1747 = vld [vmem:[#allocation10 + $0x168] sm:$0xff]
    %v1748 = vld [vmem:[#allocation10 + $0x170] sm:$0xff]
    %v1749 = vld [vmem:[#allocation10 + $0x178] sm:$0xff]
    %v1750 = vld [vmem:[#allocation10 + $0x180] sm:$0xff]
    %v1751 = vld [vmem:[#allocation10 + $0x188] sm:$0xff]
    %v1752 = vld [vmem:[#allocation10 + $0x190] sm:$0xff]
    %v1753 = vld [vmem:[#allocation10 + $0x198] sm:$0xff]
    %v1754 = vld [vmem:[#allocation10 + $0x1a0] sm:$0xff]
    %v1755 = vld [vmem:[#allocation10 + $0x1a8] sm:$0xff]
    %v1756 = vld [vmem:[#allocation10 + $0x1b0] sm:$0xff]
    %v1757 = vld [vmem:[#allocation10 + $0x1b8] sm:$0xff]
    %v1758 = vld [vmem:[#allocation10 + $0x1c0] sm:$0xff]
    %v1759 = vld [vmem:[#allocation10 + $0x1c8] sm:$0xff]
    %v1760 = vld [vmem:[#allocation10 + $0x1d0] sm:$0xff]
    %v1761 = vld [vmem:[#allocation10 + $0x1d8] sm:$0xff]
    %v1762 = vld [vmem:[#allocation10 + $0x1e0] sm:$0xff]
    %v1763 = vld [vmem:[#allocation10 + $0x1e8] sm:$0xff]
    %v1764 = vld [vmem:[#allocation10 + $0x1f0] sm:$0xff]
    %v1765 = vld [vmem:[#allocation10 + $0x1f8] sm:$0xff]
    %v1766 = vld [vmem:[%s6] sm:$0xf]
    %v1768 = vlaneseq
    %v1769 = vshrl.u32 %v1768, 7
    %v1770 = vsub.s32 0, %v1769
    %v1771 = vrot.slane %v1766, %v1770
    %v1772 = vlaneseq
    %v1773 = vshrl.u32 %v1772, 7
    %v1774 = vsub.s32 1, %v1773
    %v1775 = vrot.slane %v1766, %v1774
    %v1776 = vlaneseq
    %v1777 = vshrl.u32 %v1776, 7
    %v1778 = vsub.s32 2, %v1777
    %v1779 = vrot.slane %v1766, %v1778
    %v1780 = vlaneseq
    %v1781 = vshrl.u32 %v1780, 7
    %v1782 = vsub.s32 3, %v1781
    %v1783 = vrot.slane %v1766, %v1782
    %v1852 = vunpack.c.l.b16 %v1702
    %v1853 = vunpack.c.h.b16 %v1702
    %v1854 = vunpack.c.l.b16 %v1703
    %v1855 = vunpack.c.h.b16 %v1703
    %v1856 = vunpack.c.l.b16 %v1704
    %v1857 = vunpack.c.h.b16 %v1704
    %v1858 = vunpack.c.l.b16 %v1705
    %v1859 = vunpack.c.h.b16 %v1705
    %v1860 = vunpack.c.l.b16 %v1706
    %v1861 = vunpack.c.h.b16 %v1706
    %v1862 = vunpack.c.l.b16 %v1707
    %v1863 = vunpack.c.h.b16 %v1707
    %v1864 = vunpack.c.l.b16 %v1708
    %v1865 = vunpack.c.h.b16 %v1708
    %v1866 = vunpack.c.l.b16 %v1709
    %v1867 = vunpack.c.h.b16 %v1709
    %v1868 = vunpack.c.l.b16 %v1710
    %v1869 = vunpack.c.h.b16 %v1710
    %v1870 = vunpack.c.l.b16 %v1711
    %v1871 = vunpack.c.h.b16 %v1711
    %v1872 = vunpack.c.l.b16 %v1712
    %v1873 = vunpack.c.h.b16 %v1712
    %v1874 = vunpack.c.l.b16 %v1713
    %v1875 = vunpack.c.h.b16 %v1713
    %v1876 = vunpack.c.l.b16 %v1714
    %v1877 = vunpack.c.h.b16 %v1714
    %v1878 = vunpack.c.l.b16 %v1715
    %v1879 = vunpack.c.h.b16 %v1715
    %v1880 = vunpack.c.l.b16 %v1716
    %v1881 = vunpack.c.h.b16 %v1716
    %v1882 = vunpack.c.l.b16 %v1717
    %v1883 = vunpack.c.h.b16 %v1717
    %v1884 = vunpack.c.l.b16 %v1718
    %v1885 = vunpack.c.h.b16 %v1718
    %v1886 = vunpack.c.l.b16 %v1719
    %v1887 = vunpack.c.h.b16 %v1719
    %v1888 = vunpack.c.l.b16 %v1720
    %v1889 = vunpack.c.h.b16 %v1720
    %v1890 = vunpack.c.l.b16 %v1721
    %v1891 = vunpack.c.h.b16 %v1721
    %v1892 = vunpack.c.l.b16 %v1722
    %v1893 = vunpack.c.h.b16 %v1722
    %v1894 = vunpack.c.l.b16 %v1723
    %v1895 = vunpack.c.h.b16 %v1723
    %v1896 = vunpack.c.l.b16 %v1724
    %v1897 = vunpack.c.h.b16 %v1724
    %v1898 = vunpack.c.l.b16 %v1725
    %v1899 = vunpack.c.h.b16 %v1725
    %v1900 = vunpack.c.l.b16 %v1726
    %v1901 = vunpack.c.h.b16 %v1726
    %v1902 = vunpack.c.l.b16 %v1727
    %v1903 = vunpack.c.h.b16 %v1727
    %v1904 = vunpack.c.l.b16 %v1728
    %v1905 = vunpack.c.h.b16 %v1728
    %v1906 = vunpack.c.l.b16 %v1729
    %v1907 = vunpack.c.h.b16 %v1729
    %v1908 = vunpack.c.l.b16 %v1730
    %v1909 = vunpack.c.h.b16 %v1730
    %v1910 = vunpack.c.l.b16 %v1731
    %v1911 = vunpack.c.h.b16 %v1731
    %v1912 = vunpack.c.l.b16 %v1732
    %v1913 = vunpack.c.h.b16 %v1732
    %v1914 = vunpack.c.l.b16 %v1733
    %v1915 = vunpack.c.h.b16 %v1733
    %v1916 = vunpack.c.l.b16 %v1734
    %v1917 = vunpack.c.h.b16 %v1734
    %v1918 = vunpack.c.l.b16 %v1735
    %v1919 = vunpack.c.h.b16 %v1735
    %v1920 = vunpack.c.l.b16 %v1736
    %v1921 = vunpack.c.h.b16 %v1736
    %v1922 = vunpack.c.l.b16 %v1737
    %v1923 = vunpack.c.h.b16 %v1737
    %v1924 = vunpack.c.l.b16 %v1738
    %v1925 = vunpack.c.h.b16 %v1738
    %v1926 = vunpack.c.l.b16 %v1739
    %v1927 = vunpack.c.h.b16 %v1739
    %v1928 = vunpack.c.l.b16 %v1740
    %v1929 = vunpack.c.h.b16 %v1740
    %v1930 = vunpack.c.l.b16 %v1741
    %v1931 = vunpack.c.h.b16 %v1741
    %v1932 = vunpack.c.l.b16 %v1742
    %v1933 = vunpack.c.h.b16 %v1742
    %v1934 = vunpack.c.l.b16 %v1743
    %v1935 = vunpack.c.h.b16 %v1743
    %v1936 = vunpack.c.l.b16 %v1744
    %v1937 = vunpack.c.h.b16 %v1744
    %v1938 = vunpack.c.l.b16 %v1745
    %v1939 = vunpack.c.h.b16 %v1745
    %v1940 = vunpack.c.l.b16 %v1746
    %v1941 = vunpack.c.h.b16 %v1746
    %v1942 = vunpack.c.l.b16 %v1747
    %v1943 = vunpack.c.h.b16 %v1747
    %v1944 = vunpack.c.l.b16 %v1748
    %v1945 = vunpack.c.h.b16 %v1748
    %v1946 = vunpack.c.l.b16 %v1749
    %v1947 = vunpack.c.h.b16 %v1749
    %v1948 = vunpack.c.l.b16 %v1750
    %v1949 = vunpack.c.h.b16 %v1750
    %v1950 = vunpack.c.l.b16 %v1751
    %v1951 = vunpack.c.h.b16 %v1751
    %v1952 = vunpack.c.l.b16 %v1752
    %v1953 = vunpack.c.h.b16 %v1752
    %v1954 = vunpack.c.l.b16 %v1753
    %v1955 = vunpack.c.h.b16 %v1753
    %v1956 = vunpack.c.l.b16 %v1754
    %v1957 = vunpack.c.h.b16 %v1754
    %v1958 = vunpack.c.l.b16 %v1755
    %v1959 = vunpack.c.h.b16 %v1755
    %v1960 = vunpack.c.l.b16 %v1756
    %v1961 = vunpack.c.h.b16 %v1756
    %v1962 = vunpack.c.l.b16 %v1757
    %v1963 = vunpack.c.h.b16 %v1757
    %v1964 = vunpack.c.l.b16 %v1758
    %v1965 = vunpack.c.h.b16 %v1758
    %v1966 = vunpack.c.l.b16 %v1759
    %v1967 = vunpack.c.h.b16 %v1759
    %v1968 = vunpack.c.l.b16 %v1760
    %v1969 = vunpack.c.h.b16 %v1760
    %v1970 = vunpack.c.l.b16 %v1761
    %v1971 = vunpack.c.h.b16 %v1761
    %v1972 = vunpack.c.l.b16 %v1762
    %v1973 = vunpack.c.h.b16 %v1762
    %v1974 = vunpack.c.l.b16 %v1763
    %v1975 = vunpack.c.h.b16 %v1763
    %v1976 = vunpack.c.l.b16 %v1764
    %v1977 = vunpack.c.h.b16 %v1764
    %v1978 = vunpack.c.l.b16 %v1765
    %v1979 = vunpack.c.h.b16 %v1765
    %v1980 = vpack.c.b16 %v1856, %v1852
    %v1981 = vpack.c.b16 %v1857, %v1853
    %v1982 = vpack.c.b16 %v1858, %v1854
    %v1983 = vpack.c.b16 %v1859, %v1855
    %v1984 = vpack.c.b16 %v1864, %v1860
    %v1985 = vpack.c.b16 %v1865, %v1861
    %v1986 = vpack.c.b16 %v1866, %v1862
    %v1987 = vpack.c.b16 %v1867, %v1863
    %v1988 = vpack.c.b16 %v1872, %v1868
    %v1989 = vpack.c.b16 %v1873, %v1869
    %v1990 = vpack.c.b16 %v1874, %v1870
    %v1991 = vpack.c.b16 %v1875, %v1871
    %v1992 = vpack.c.b16 %v1880, %v1876
    %v1993 = vpack.c.b16 %v1881, %v1877
    %v1994 = vpack.c.b16 %v1882, %v1878
    %v1995 = vpack.c.b16 %v1883, %v1879
    %v1996 = vpack.c.b16 %v1888, %v1884
    %v1997 = vpack.c.b16 %v1889, %v1885
    %v1998 = vpack.c.b16 %v1890, %v1886
    %v1999 = vpack.c.b16 %v1891, %v1887
    %v2000 = vpack.c.b16 %v1896, %v1892
    %v2001 = vpack.c.b16 %v1897, %v1893
    %v2002 = vpack.c.b16 %v1898, %v1894
    %v2003 = vpack.c.b16 %v1899, %v1895
    %v2004 = vpack.c.b16 %v1904, %v1900
    %v2005 = vpack.c.b16 %v1905, %v1901
    %v2006 = vpack.c.b16 %v1906, %v1902
    %v2007 = vpack.c.b16 %v1907, %v1903
    %v2008 = vpack.c.b16 %v1912, %v1908
    %v2009 = vpack.c.b16 %v1913, %v1909
    %v2010 = vpack.c.b16 %v1914, %v1910
    %v2011 = vpack.c.b16 %v1915, %v1911
    %v2012 = vpack.c.b16 %v1920, %v1916
    %v2013 = vpack.c.b16 %v1921, %v1917
    %v2014 = vpack.c.b16 %v1922, %v1918
    %v2015 = vpack.c.b16 %v1923, %v1919
    %v2016 = vpack.c.b16 %v1928, %v1924
    %v2017 = vpack.c.b16 %v1929, %v1925
    %v2018 = vpack.c.b16 %v1930, %v1926
    %v2019 = vpack.c.b16 %v1931, %v1927
    %v2020 = vpack.c.b16 %v1936, %v1932
    %v2021 = vpack.c.b16 %v1937, %v1933
    %v2022 = vpack.c.b16 %v1938, %v1934
    %v2023 = vpack.c.b16 %v1939, %v1935
    %v2024 = vpack.c.b16 %v1944, %v1940
    %v2025 = vpack.c.b16 %v1945, %v1941
    %v2026 = vpack.c.b16 %v1946, %v1942
    %v2027 = vpack.c.b16 %v1947, %v1943
    %v2028 = vpack.c.b16 %v1952, %v1948
    %v2029 = vpack.c.b16 %v1953, %v1949
    %v2030 = vpack.c.b16 %v1954, %v1950
    %v2031 = vpack.c.b16 %v1955, %v1951
    %v2032 = vpack.c.b16 %v1960, %v1956
    %v2033 = vpack.c.b16 %v1961, %v1957
    %v2034 = vpack.c.b16 %v1962, %v1958
    %v2035 = vpack.c.b16 %v1963, %v1959
    %v2036 = vpack.c.b16 %v1968, %v1964
    %v2037 = vpack.c.b16 %v1969, %v1965
    %v2038 = vpack.c.b16 %v1970, %v1966
    %v2039 = vpack.c.b16 %v1971, %v1967
    %v2040 = vpack.c.b16 %v1976, %v1972
    %v2041 = vpack.c.b16 %v1977, %v1973
    %v2042 = vpack.c.b16 %v1978, %v1974
    %v2043 = vpack.c.b16 %v1979, %v1975
    %2108 = vmatprep.subr.bf16.mxu0 %v1981
    %2109 = vmatpush1.bf16.msra.mxu0 %v1980
    %2110 = vmatprep.subr.bf16.mxu0 %v1985
    %2111 = vmatpush1.bf16.msra.mxu0 %v1984
    %2112 = vmatprep.subr.bf16.mxu0 %v1989
    %2113 = vmatpush1.bf16.msra.mxu0 %v1988
    %2114 = vmatprep.subr.bf16.mxu0 %v1993
    %2115 = vmatpush1.bf16.msra.mxu0 %v1992
    %2116 = vmatprep.subr.bf16.mxu0 %v1997
    %2117 = vmatpush1.bf16.msra.mxu0 %v1996
    %2118 = vmatprep.subr.bf16.mxu0 %v2001
    %2119 = vmatpush1.bf16.msra.mxu0 %v2000
    %2120 = vmatprep.subr.bf16.mxu0 %v2005
    %2121 = vmatpush1.bf16.msra.mxu0 %v2004
    %2122 = vmatprep.subr.bf16.mxu0 %v2009
    %2123 = vmatpush1.bf16.msra.mxu0 %v2008
    %2124 = vmatprep.subr.bf16.mxu0 %v2013
    %2125 = vmatpush1.bf16.msra.mxu0 %v2012
    %2126 = vmatprep.subr.bf16.mxu0 %v2017
    %2127 = vmatpush1.bf16.msra.mxu0 %v2016
    %2128 = vmatprep.subr.bf16.mxu0 %v2021
    %2129 = vmatpush1.bf16.msra.mxu0 %v2020
    %2130 = vmatprep.subr.bf16.mxu0 %v2025
    %2131 = vmatpush1.bf16.msra.mxu0 %v2024
    %2132 = vmatprep.subr.bf16.mxu0 %v2029
    %2133 = vmatpush1.bf16.msra.mxu0 %v2028
    %2134 = vmatprep.subr.bf16.mxu0 %v2033
    %2135 = vmatpush1.bf16.msra.mxu0 %v2032
    %2136 = vmatprep.subr.bf16.mxu0 %v2037
    %2137 = vmatpush1.bf16.msra.mxu0 %v2036
    %2138 = vmatprep.subr.bf16.mxu0 %v2041
    %2139 = vmatpush1.bf16.msra.mxu0 %v2040
    %2140 = vmatprep.mubr.bf16.mxu0 %v1701
    %2141 = vmatmul.mubr.bf16.gmra.mrb[0].mxu0 %v1700
    %v2142 = vpop.f32.mrb[0].mxu0
    %v2143 = vadd.f32 %v1771, %v2142
    %v2144 = vpop.f32.mrb[0].mxu0
    %v2145 = vadd.f32 %v1775, %v2144
    %v2146 = vpop.f32.mrb[0].mxu0
    %v2147 = vadd.f32 %v1771, %v2146
    %v2148 = vpop.f32.mrb[0].mxu0
    %v2149 = vadd.f32 %v1775, %v2148
    %2150 = vdwg.mxu0
    %2151 = vmatprep.subr.bf16.mxu0 %v1983
    %2152 = vmatpush1.bf16.msra.mxu0 %v1982
    %2153 = vmatprep.subr.bf16.mxu0 %v1987
    %2154 = vmatpush1.bf16.msra.mxu0 %v1986
    %2155 = vmatprep.subr.bf16.mxu0 %v1991
    %2156 = vmatpush1.bf16.msra.mxu0 %v1990
    %2157 = vmatprep.subr.bf16.mxu0 %v1995
    %2158 = vmatpush1.bf16.msra.mxu0 %v1994
    %2159 = vmatprep.subr.bf16.mxu0 %v1999
    %2160 = vmatpush1.bf16.msra.mxu0 %v1998
    %2161 = vmatprep.subr.bf16.mxu0 %v2003
    %2162 = vmatpush1.bf16.msra.mxu0 %v2002
    %2163 = vmatprep.subr.bf16.mxu0 %v2007
    %2164 = vmatpush1.bf16.msra.mxu0 %v2006
    %2165 = vmatprep.subr.bf16.mxu0 %v2011
    %2166 = vmatpush1.bf16.msra.mxu0 %v2010
    %2167 = vmatprep.subr.bf16.mxu0 %v2015
    %2168 = vmatpush1.bf16.msra.mxu0 %v2014
    %2169 = vmatprep.subr.bf16.mxu0 %v2019
    %2170 = vmatpush1.bf16.msra.mxu0 %v2018
    %2171 = vmatprep.subr.bf16.mxu0 %v2023
    %2172 = vmatpush1.bf16.msra.mxu0 %v2022
    %2173 = vmatprep.subr.bf16.mxu0 %v2027
    %2174 = vmatpush1.bf16.msra.mxu0 %v2026
    %2175 = vmatprep.subr.bf16.mxu0 %v2031
    %2176 = vmatpush1.bf16.msra.mxu0 %v2030
    %2177 = vmatprep.subr.bf16.mxu0 %v2035
    %2178 = vmatpush1.bf16.msra.mxu0 %v2034
    %2179 = vmatprep.subr.bf16.mxu0 %v2039
    %2180 = vmatpush1.bf16.msra.mxu0 %v2038
    %2181 = vmatprep.subr.bf16.mxu0 %v2043
    %2182 = vmatpush1.bf16.msra.mxu0 %v2042
    %2183 = vmatprep.mubr.bf16.mxu0 %v1701
    %2184 = vmatmul.mubr.bf16.gmra.mrb[0].mxu0 %v1700
    %v2185 = vpop.f32.mrb[0].mxu0
    %v2186 = vadd.f32 %v1779, %v2185
    %v2187 = vpop.f32.mrb[0].mxu0
    %v2188 = vadd.f32 %v1783, %v2187
    %v2189 = vpop.f32.mrb[0].mxu0
    %v2190 = vadd.f32 %v1779, %v2189
    %v2191 = vpop.f32.mrb[0].mxu0
    %v2192 = vadd.f32 %v1783, %v2191
    %2193 = vdwg.mxu0
    %v2194 = vmax.f32 %v2143, 0.0
    %v2195 = vmax.f32 %v2145, 0.0
    %v2196 = vmax.f32 %v2186, 0.0
    %v2197 = vmax.f32 %v2188, 0.0
    %v2198 = vmax.f32 %v2147, 0.0
    %v2199 = vmax.f32 %v2149, 0.0
    %v2200 = vmax.f32 %v2190, 0.0
    %v2201 = vmax.f32 %v2192, 0.0
    %v2202 = vpack.c.bf16 %v2198, %v2194
    %v2203 = vpack.c.bf16 %v2199, %v2195
    %v2204 = vpack.c.bf16 %v2200, %v2196
    %v2205 = vpack.c.bf16 %v2201, %v2197
    %v2206 = vld [vmem:[#allocation11] sm:$0xf]
    %v2207 = vld [vmem:[#allocation11 + $0x4] sm:$0xf]
    %v2208 = vld [vmem:[#allocation11 + $0x8] sm:$0xf]
    %v2209 = vld [vmem:[#allocation11 + $0xc] sm:$0xf]
    %v2210 = vld [vmem:[#allocation11 + $0x10] sm:$0xf]
    %v2211 = vld [vmem:[#allocation11 + $0x14] sm:$0xf]
    %v2212 = vld [vmem:[#allocation11 + $0x18] sm:$0xf]
    %v2213 = vld [vmem:[#allocation11 + $0x1c] sm:$0xf]
    %v2214 = vld [vmem:[#allocation11 + $0x20] sm:$0xf]
    %v2215 = vld [vmem:[#allocation11 + $0x24] sm:$0xf]
    %v2216 = vld [vmem:[#allocation11 + $0x28] sm:$0xf]
    %v2217 = vld [vmem:[#allocation11 + $0x2c] sm:$0xf]
    %v2218 = vld [vmem:[#allocation11 + $0x30] sm:$0xf]
    %v2219 = vld [vmem:[#allocation11 + $0x34] sm:$0xf]
    %v2220 = vld [vmem:[#allocation11 + $0x38] sm:$0xf]
    %v2221 = vld [vmem:[#allocation11 + $0x3c] sm:$0xf]
    %v2222 = vld [vmem:[#allocation11 + $0x40] sm:$0xf]
    %v2223 = vld [vmem:[#allocation11 + $0x44] sm:$0xf]
    %v2224 = vld [vmem:[#allocation11 + $0x48] sm:$0xf]
    %v2225 = vld [vmem:[#allocation11 + $0x4c] sm:$0xf]
    %v2226 = vld [vmem:[#allocation11 + $0x50] sm:$0xf]
    %v2227 = vld [vmem:[#allocation11 + $0x54] sm:$0xf]
    %v2228 = vld [vmem:[#allocation11 + $0x58] sm:$0xf]
    %v2229 = vld [vmem:[#allocation11 + $0x5c] sm:$0xf]
    %v2230 = vld [vmem:[#allocation11 + $0x60] sm:$0xf]
    %v2231 = vld [vmem:[#allocation11 + $0x64] sm:$0xf]
    %v2232 = vld [vmem:[#allocation11 + $0x68] sm:$0xf]
    %v2233 = vld [vmem:[#allocation11 + $0x6c] sm:$0xf]
    %v2234 = vld [vmem:[#allocation11 + $0x70] sm:$0xf]
    %v2235 = vld [vmem:[#allocation11 + $0x74] sm:$0xf]
    %v2236 = vld [vmem:[#allocation11 + $0x78] sm:$0xf]
    %v2237 = vld [vmem:[#allocation11 + $0x7c] sm:$0xf]
    %v2238 = vld [vmem:[#allocation11 + $0x80] sm:$0xf]
    %v2239 = vld [vmem:[#allocation11 + $0x84] sm:$0xf]
    %v2240 = vld [vmem:[#allocation11 + $0x88] sm:$0xf]
    %v2241 = vld [vmem:[#allocation11 + $0x8c] sm:$0xf]
    %v2242 = vld [vmem:[#allocation11 + $0x90] sm:$0xf]
    %v2243 = vld [vmem:[#allocation11 + $0x94] sm:$0xf]
    %v2244 = vld [vmem:[#allocation11 + $0x98] sm:$0xf]
    %v2245 = vld [vmem:[#allocation11 + $0x9c] sm:$0xf]
    %v2246 = vld [vmem:[#allocation11 + $0xa0] sm:$0xf]
    %v2247 = vld [vmem:[#allocation11 + $0xa4] sm:$0xf]
    %v2248 = vld [vmem:[#allocation11 + $0xa8] sm:$0xf]
    %v2249 = vld [vmem:[#allocation11 + $0xac] sm:$0xf]
    %v2250 = vld [vmem:[#allocation11 + $0xb0] sm:$0xf]
    %v2251 = vld [vmem:[#allocation11 + $0xb4] sm:$0xf]
    %v2252 = vld [vmem:[#allocation11 + $0xb8] sm:$0xf]
    %v2253 = vld [vmem:[#allocation11 + $0xbc] sm:$0xf]
    %v2254 = vld [vmem:[#allocation11 + $0xc0] sm:$0xf]
    %v2255 = vld [vmem:[#allocation11 + $0xc4] sm:$0xf]
    %v2256 = vld [vmem:[#allocation11 + $0xc8] sm:$0xf]
    %v2257 = vld [vmem:[#allocation11 + $0xcc] sm:$0xf]
    %v2258 = vld [vmem:[#allocation11 + $0xd0] sm:$0xf]
    %v2259 = vld [vmem:[#allocation11 + $0xd4] sm:$0xf]
    %v2260 = vld [vmem:[#allocation11 + $0xd8] sm:$0xf]
    %v2261 = vld [vmem:[#allocation11 + $0xdc] sm:$0xf]
    %v2262 = vld [vmem:[#allocation11 + $0xe0] sm:$0xf]
    %v2263 = vld [vmem:[#allocation11 + $0xe4] sm:$0xf]
    %v2264 = vld [vmem:[#allocation11 + $0xe8] sm:$0xf]
    %v2265 = vld [vmem:[#allocation11 + $0xec] sm:$0xf]
    %v2266 = vld [vmem:[#allocation11 + $0xf0] sm:$0xf]
    %v2267 = vld [vmem:[#allocation11 + $0xf4] sm:$0xf]
    %v2268 = vld [vmem:[#allocation11 + $0xf8] sm:$0xf]
    %v2269 = vld [vmem:[#allocation11 + $0xfc] sm:$0xf]
    %v2270 = vld [vmem:[%s8] sm:$0x1]
    %v2272 = vlaneseq
    %v2273 = vshrl.u32 %v2272, 7
    %v2274 = vsub.s32 0, %v2273
    %v2275 = vrot.slane %v2270, %v2274
    %v2341 = vunpack.c.l.b16 %v2206
    %v2342 = vunpack.c.l.b16 %v2207
    %v2343 = vunpack.c.l.b16 %v2208
    %v2344 = vunpack.c.l.b16 %v2209
    %v2345 = vunpack.c.l.b16 %v2210
    %v2346 = vunpack.c.l.b16 %v2211
    %v2347 = vunpack.c.l.b16 %v2212
    %v2348 = vunpack.c.l.b16 %v2213
    %v2349 = vunpack.c.l.b16 %v2214
    %v2350 = vunpack.c.l.b16 %v2215
    %v2351 = vunpack.c.l.b16 %v2216
    %v2352 = vunpack.c.l.b16 %v2217
    %v2353 = vunpack.c.l.b16 %v2218
    %v2354 = vunpack.c.l.b16 %v2219
    %v2355 = vunpack.c.l.b16 %v2220
    %v2356 = vunpack.c.l.b16 %v2221
    %v2357 = vunpack.c.l.b16 %v2222
    %v2358 = vunpack.c.l.b16 %v2223
    %v2359 = vunpack.c.l.b16 %v2224
    %v2360 = vunpack.c.l.b16 %v2225
    %v2361 = vunpack.c.l.b16 %v2226
    %v2362 = vunpack.c.l.b16 %v2227
    %v2363 = vunpack.c.l.b16 %v2228
    %v2364 = vunpack.c.l.b16 %v2229
    %v2365 = vunpack.c.l.b16 %v2230
    %v2366 = vunpack.c.l.b16 %v2231
    %v2367 = vunpack.c.l.b16 %v2232
    %v2368 = vunpack.c.l.b16 %v2233
    %v2369 = vunpack.c.l.b16 %v2234
    %v2370 = vunpack.c.l.b16 %v2235
    %v2371 = vunpack.c.l.b16 %v2236
    %v2372 = vunpack.c.l.b16 %v2237
    %v2373 = vunpack.c.l.b16 %v2238
    %v2374 = vunpack.c.l.b16 %v2239
    %v2375 = vunpack.c.l.b16 %v2240
    %v2376 = vunpack.c.l.b16 %v2241
    %v2377 = vunpack.c.l.b16 %v2242
    %v2378 = vunpack.c.l.b16 %v2243
    %v2379 = vunpack.c.l.b16 %v2244
    %v2380 = vunpack.c.l.b16 %v2245
    %v2381 = vunpack.c.l.b16 %v2246
    %v2382 = vunpack.c.l.b16 %v2247
    %v2383 = vunpack.c.l.b16 %v2248
    %v2384 = vunpack.c.l.b16 %v2249
    %v2385 = vunpack.c.l.b16 %v2250
    %v2386 = vunpack.c.l.b16 %v2251
    %v2387 = vunpack.c.l.b16 %v2252
    %v2388 = vunpack.c.l.b16 %v2253
    %v2389 = vunpack.c.l.b16 %v2254
    %v2390 = vunpack.c.l.b16 %v2255
    %v2391 = vunpack.c.l.b16 %v2256
    %v2392 = vunpack.c.l.b16 %v2257
    %v2393 = vunpack.c.l.b16 %v2258
    %v2394 = vunpack.c.l.b16 %v2259
    %v2395 = vunpack.c.l.b16 %v2260
    %v2396 = vunpack.c.l.b16 %v2261
    %v2397 = vunpack.c.l.b16 %v2262
    %v2398 = vunpack.c.l.b16 %v2263
    %v2399 = vunpack.c.l.b16 %v2264
    %v2400 = vunpack.c.l.b16 %v2265
    %v2401 = vunpack.c.l.b16 %v2266
    %v2402 = vunpack.c.l.b16 %v2267
    %v2403 = vunpack.c.l.b16 %v2268
    %v2404 = vunpack.c.l.b16 %v2269
    %v2405 = vpack.c.b16 %v2342, %v2341
    %v2406 = vpack.c.b16 %v2344, %v2343
    %v2407 = vpack.c.b16 %v2346, %v2345
    %v2408 = vpack.c.b16 %v2348, %v2347
    %v2409 = vpack.c.b16 %v2350, %v2349
    %v2410 = vpack.c.b16 %v2352, %v2351
    %v2411 = vpack.c.b16 %v2354, %v2353
    %v2412 = vpack.c.b16 %v2356, %v2355
    %v2413 = vpack.c.b16 %v2358, %v2357
    %v2414 = vpack.c.b16 %v2360, %v2359
    %v2415 = vpack.c.b16 %v2362, %v2361
    %v2416 = vpack.c.b16 %v2364, %v2363
    %v2417 = vpack.c.b16 %v2366, %v2365
    %v2418 = vpack.c.b16 %v2368, %v2367
    %v2419 = vpack.c.b16 %v2370, %v2369
    %v2420 = vpack.c.b16 %v2372, %v2371
    %v2421 = vpack.c.b16 %v2374, %v2373
    %v2422 = vpack.c.b16 %v2376, %v2375
    %v2423 = vpack.c.b16 %v2378, %v2377
    %v2424 = vpack.c.b16 %v2380, %v2379
    %v2425 = vpack.c.b16 %v2382, %v2381
    %v2426 = vpack.c.b16 %v2384, %v2383
    %v2427 = vpack.c.b16 %v2386, %v2385
    %v2428 = vpack.c.b16 %v2388, %v2387
    %v2429 = vpack.c.b16 %v2390, %v2389
    %v2430 = vpack.c.b16 %v2392, %v2391
    %v2431 = vpack.c.b16 %v2394, %v2393
    %v2432 = vpack.c.b16 %v2396, %v2395
    %v2433 = vpack.c.b16 %v2398, %v2397
    %v2434 = vpack.c.b16 %v2400, %v2399
    %v2435 = vpack.c.b16 %v2402, %v2401
    %v2436 = vpack.c.b16 %v2404, %v2403
    %2469 = vmatprep.subr.bf16.mxu0 0
    %2470 = vmatpush1.bf16.msra.mxu0 %v2405
    %2471 = vmatprep.subr.bf16.mxu0 0
    %2472 = vmatpush1.bf16.msra.mxu0 %v2406
    %2473 = vmatprep.subr.bf16.mxu0 0
    %2474 = vmatpush1.bf16.msra.mxu0 %v2407
    %2475 = vmatprep.subr.bf16.mxu0 0
    %2476 = vmatpush1.bf16.msra.mxu0 %v2408
    %2477 = vmatprep.subr.bf16.mxu0 0
    %2478 = vmatpush1.bf16.msra.mxu0 %v2409
    %2479 = vmatprep.subr.bf16.mxu0 0
    %2480 = vmatpush1.bf16.msra.mxu0 %v2410
    %2481 = vmatprep.subr.bf16.mxu0 0
    %2482 = vmatpush1.bf16.msra.mxu0 %v2411
    %2483 = vmatprep.subr.bf16.mxu0 0
    %2484 = vmatpush1.bf16.msra.mxu0 %v2412
    %2485 = vmatprep.subr.bf16.mxu0 0
    %2486 = vmatpush1.bf16.msra.mxu0 %v2413
    %2487 = vmatprep.subr.bf16.mxu0 0
    %2488 = vmatpush1.bf16.msra.mxu0 %v2414
    %2489 = vmatprep.subr.bf16.mxu0 0
    %2490 = vmatpush1.bf16.msra.mxu0 %v2415
    %2491 = vmatprep.subr.bf16.mxu0 0
    %2492 = vmatpush1.bf16.msra.mxu0 %v2416
    %2493 = vmatprep.subr.bf16.mxu0 0
    %2494 = vmatpush1.bf16.msra.mxu0 %v2417
    %2495 = vmatprep.subr.bf16.mxu0 0
    %2496 = vmatpush1.bf16.msra.mxu0 %v2418
    %2497 = vmatprep.subr.bf16.mxu0 0
    %2498 = vmatpush1.bf16.msra.mxu0 %v2419
    %2499 = vmatprep.subr.bf16.mxu0 0
    %2500 = vmatpush1.bf16.msra.mxu0 %v2420
    %2501 = vmatprep.mubr.bf16.mxu0 %v2203
    %2502 = vmatmul.mubr.bf16.gmra.mrb[0].mxu0 %v2202
    %v2503 = vpop.f32.mrb[0].mxu0
    %v2504 = vadd.f32 %v2275, %v2503
    %v2505 = vpop.f32.mrb[0].mxu0
    %v2506 = vpop.f32.mrb[0].mxu0
    %v2507 = vadd.f32 %v2275, %v2506
    %v2508 = vpop.f32.mrb[0].mxu0
    %2509 = vdwg.mxu0
    %2510 = vmatprep.subr.bf16.mxu0 0
    %2511 = vmatpush1.bf16.msra.mxu0 %v2421
    %2512 = vmatprep.subr.bf16.mxu0 0
    %2513 = vmatpush1.bf16.msra.mxu0 %v2422
    %2514 = vmatprep.subr.bf16.mxu0 0
    %2515 = vmatpush1.bf16.msra.mxu0 %v2423
    %2516 = vmatprep.subr.bf16.mxu0 0
    %2517 = vmatpush1.bf16.msra.mxu0 %v2424
    %2518 = vmatprep.subr.bf16.mxu0 0
    %2519 = vmatpush1.bf16.msra.mxu0 %v2425
    %2520 = vmatprep.subr.bf16.mxu0 0
    %2521 = vmatpush1.bf16.msra.mxu0 %v2426
    %2522 = vmatprep.subr.bf16.mxu0 0
    %2523 = vmatpush1.bf16.msra.mxu0 %v2427
    %2524 = vmatprep.subr.bf16.mxu0 0
    %2525 = vmatpush1.bf16.msra.mxu0 %v2428
    %2526 = vmatprep.subr.bf16.mxu0 0
    %2527 = vmatpush1.bf16.msra.mxu0 %v2429
    %2528 = vmatprep.subr.bf16.mxu0 0
    %2529 = vmatpush1.bf16.msra.mxu0 %v2430
    %2530 = vmatprep.subr.bf16.mxu0 0
    %2531 = vmatpush1.bf16.msra.mxu0 %v2431
    %2532 = vmatprep.subr.bf16.mxu0 0
    %2533 = vmatpush1.bf16.msra.mxu0 %v2432
    %2534 = vmatprep.subr.bf16.mxu0 0
    %2535 = vmatpush1.bf16.msra.mxu0 %v2433
    %2536 = vmatprep.subr.bf16.mxu0 0
    %2537 = vmatpush1.bf16.msra.mxu0 %v2434
    %2538 = vmatprep.subr.bf16.mxu0 0
    %2539 = vmatpush1.bf16.msra.mxu0 %v2435
    %2540 = vmatprep.subr.bf16.mxu0 0
    %2541 = vmatpush1.bf16.msra.mxu0 %v2436
    %2542 = vmatprep.mubr.bf16.mxu0 %v2205
    %2543 = vmatmul.mubr.bf16.gmra.mrb[0].mxu0 %v2204
    %v2544 = vpop.f32.mrb[0].mxu0
    %v2545 = vadd.f32 %v2504, %v2544
    %v2546 = vpop.f32.mrb[0].mxu0
    %v2547 = vpop.f32.mrb[0].mxu0
    %v2548 = vadd.f32 %v2507, %v2547
    %v2549 = vpop.f32.mrb[0].mxu0
    %2550 = vdwg.mxu0
    %v2551 = vmax.f32 %v2545, 0.0
    %v2552 = vmax.f32 %v2548, 0.0
    %v2553 = vpack.c.bf16 %v2552, %v2551
    %v2555 = vunpack.c.l.b16 %v2553
    %v2556 = vunpack.c.h.b16 %v2553
    %v2557 = vpack.c.b16 %v2555, %v2555
    %v2558 = vpack.c.b16 %v2556, %v2556
    %2561 = vst [vmem:[#allocation13] sm:$0xf] %v2557
    %2562 = vst [vmem:[#allocation13 + $0x4] sm:$0xf] %v2558
    // Predicated region
    $region62: #{tpu_custom_call.1} parent=1 // pred_check
      _
    $region63: #{tpu_custom_call.1} parent=1 // pred_check_branch
      %2564 = sbr.rel (0) target = $region65
    $region64: #{tpu_custom_call.1} parent=1 // pred_region
      %s2566 = ssub.s32 128, 128
      %2567 = vsyncadd [#allocation4], %s2566
      %s2568 = sshll.u32 [#allocation13], 4
      %s2569 = int_to_ptr.vmem [resolvable:$true] %s2568
      %2574 = dma.vmem_to_hbm [thread:$0]  %s2569, 128, %s9, [#allocation4], 64, 64, 4
    $region65: #{tpu_custom_call.1} parent=1 // pred_fallthru
      _
    // Predicated region
    $region66: #{tpu_custom_call.1} parent=1 // pred_check
      _
    $region67: #{tpu_custom_call.1} parent=1 // pred_check_branch
      %2576 = sbr.rel (0) target = $region69
    $region68: #{tpu_custom_call.1} parent=1 // pred_region
      %2577 = dma.done [#allocation4], 128
    $region69: #{tpu_custom_call.1} parent=1 // pred_fallthru
      _
    %2578 = vsyncpa [#allocation3], 1
    %2579 = vsyncpa [#allocation6], 1
    %2580 = vsyncpa [#allocation9], 1
    %2581 = vsyncpa [#allocation12], 1
    %2582 = vsyncpa [#allocation4], 1

</llo_original>
